<compile_context>
chip_gen: v7x
topology: tpu7x:2x2x1
jax: 0.10.0
libtpu: 0.0.40
codegen_flags: <defaults>
</compile_context>

<pallas_src>
import functools

import numpy as np

import jax
import jax.numpy as jnp
from jax import lax
from jax.experimental import pallas as pl
from jax.experimental.pallas import tpu as pltpu


def _cyclic_lane_shift(a, off, hw):
    """shifted[:, p] = a[:, (p + off) % hw]  (== jnp.roll(a, -off, axis=1)).

    Realized as two static lane slices + lane concat (cheap shuffle work,
    off the load/store critical path)."""
    s = off % hw
    if s == 0:
        return a
    return jnp.concatenate([a[:, s:], a[:, :s]], axis=1)


def _fused_convnet_kernel(x_ref, m_ref, *refs, H, W, K):
    """All 5 same-padded convs for one batch element, fully in VMEM.

    x_ref : (1, C0, H*W)   activations: channels on sublanes, H*W on lanes
    m_ref : (K*K, H*W)     per-tap validity masks (1.0 interior, 0.0 where the
                           'same' zero-padding region would be read)
    refs  : w1, b1, ..., w5, b5, o_ref
            w_i : (Cout_i, K*K*Cin_i)  im2col-folded weights
            b_i : (Cout_i, 1)
    o_ref : (1, Cout_last, H*W)
    """
    o_ref = refs[-1]
    wb = refs[:-1]
    hw = H * W
    pad = (K - 1) // 2          # odd K -> symmetric 'same' (PyTorch semantics)

    masks = m_ref[...]          # (K*K, hw) loaded once, reused by all layers

    # Trace-time cache so each (tap, channels) mask broadcast is emitted once,
    # not once per layer (JAX does not CSE broadcast_in_dim).
    bcast_cache = {}

    def tap_mask(t, c):
        key = (t, c)
        if key not in bcast_cache:
            bcast_cache[key] = jnp.broadcast_to(masks[t:t + 1, :], (c, hw))
        return bcast_cache[key]

    a = x_ref[0].astype(jnp.float32)                     # (Cin, hw)

    for li in range(len(wb) // 2):
        w_ref, b_ref = wb[2 * li], wb[2 * li + 1]
        cin = a.shape[0]
        taps = []
        for kh in range(K):
            dh = kh - pad
            for kw in range(K):
                dw = kw - pad
                off = dh * W + dw
                t = kh * K + kw
                if off == 0:
                    taps.append(a)                       # center tap: mask==1
                else:
                    taps.append(_cyclic_lane_shift(a, off, hw)
                                * tap_mask(t, cin))
        # im2col patch matrix -> ONE MXU push per layer
        # (contraction dim K*K*Cin instead of 9 tiny Cin-wide matmuls).
        patches = jnp.concatenate(taps, axis=0)          # (K*K*cin, hw)
        a = jnp.dot(w_ref[...], patches,
                    preferred_element_type=jnp.float32)  # (Cout, hw) lane-dense
        a = a + b_ref[...]                               # (Cout,1) lane-bcast

    o_ref[0] = a.astype(o_ref.dtype)


def _tap_masks(H, W, K):
    """Static per-tap validity masks over the flattened H*W lane axis."""
    pad = (K - 1) // 2
    hw = H * W
    h = np.arange(hw) // W
    w = np.arange(hw) % W
    masks = np.zeros((K * K, hw), np.float32)
    for kh in range(K):
        for kw in range(K):
            dh, dw = kh - pad, kw - pad
            valid = ((h + dh >= 0) & (h + dh < H) &
                     (w + dw >= 0) & (w + dw < W))
            masks[kh * K + kw] = valid.astype(np.float32)
    return masks


@jax.jit
def iir_conv_net_forward(x_nchw, params):
    """Forward: 4 (stand-in) iir_blocks + final Conv2d, all padding='same'.

    x_nchw : (N, Cin, H, W)
    params : list of 5 (w_hwio, b) with w_hwio (K, K, Cin_i, Cout_i).
    """
    N, cin0, H, W = x_nchw.shape
    hw = H * W
    K = params[0][0].shape[0]
    assert K % 2 == 1, "padding='same' asymmetric for even K not handled"
    # TODO(synk): even kernel_size needs asymmetric padding to match PyTorch.

    # Lane-dense layout (N, C, H*W).  Pad input channels up to a sublane
    # multiple (8) so every in-kernel sublane concat is tile-aligned; the
    # matching extra weight rows are zero, so the math is unchanged.
    sub = 8
    cpad = (-cin0) % sub
    x = x_nchw.reshape(N, cin0, hw)
    if cpad:
        x = jnp.pad(x, ((0, 0), (0, cpad), (0, 0)))

    ws, bs = [], []
    for i, (w, b) in enumerate(params):
        if i == 0 and cpad:
            w = jnp.pad(w, ((0, 0), (0, 0), (0, cpad), (0, 0)))
        kh_, kw_, ci, co = w.shape
        # (K,K,Cin,Cout) -> (Cout, K*K*Cin): tap-major / channel-minor, which
        # matches the in-kernel tap concatenation order.
        ws.append(jnp.transpose(w, (3, 0, 1, 2)).reshape(co, kh_ * kw_ * ci))
        bs.append(b.reshape(co, 1))
    cout = ws[-1].shape[0]

    masks = jnp.asarray(_tap_masks(H, W, K))

    operands = [x, masks]
    in_specs = [
        pl.BlockSpec((1, x.shape[1], hw), lambda n: (n, 0, 0)),
        pl.BlockSpec(masks.shape, lambda n: (0, 0)),
    ]
    flops = 0
    bytes_accessed = (x.size + masks.size + N * cout * hw) * 4
    for w_mat, b2 in zip(ws, bs):
        operands += [w_mat, b2]
        in_specs += [pl.BlockSpec(w_mat.shape, lambda n: (0, 0)),
                     pl.BlockSpec(b2.shape, lambda n: (0, 0))]
        flops += 2 * N * w_mat.shape[0] * w_mat.shape[1] * hw
        bytes_accessed += (w_mat.size + b2.size) * 4

    kernel = functools.partial(_fused_convnet_kernel, H=H, W=W, K=K)
    out = pl.pallas_call(
        kernel,
        out_shape=jax.ShapeDtypeStruct((N, cout, hw), x_nchw.dtype),
        grid_spec=pltpu.PrefetchScalarGridSpec(
            num_scalar_prefetch=0,
            grid=(N,),
            in_specs=in_specs,
            out_specs=pl.BlockSpec((1, cout, hw), lambda n: (n, 0, 0)),
        ),
        compiler_params=pltpu.CompilerParams(
            dimension_semantics=("parallel",)),
        cost_estimate=pl.CostEstimate(
            flops=flops, transcendentals=0, bytes_accessed=bytes_accessed),
    )(*operands)
    return out.reshape(N, cout, H, W)


def init_params(key, in_channels, num_filters, kernel_size, num_classes):
    """Deterministic parameter init matching IIRConvNet layer shapes (HWIO)."""
    chans = [in_channels] + [num_filters] * 4 + [num_classes]
    params = []
    for i in range(5):
        key, kw, kb = jax.random.split(key, 3)
        cin, cout = chans[i], chans[i + 1]
        w = jax.random.normal(kw, (kernel_size, kernel_size, cin, cout),
                              jnp.float32) * 0.1
        b = jax.random.normal(kb, (cout,), jnp.float32) * 0.01
        params.append((w, b))
    return params


def reference_forward(x_nchw, params):
    x = jnp.transpose(x_nchw, (0, 2, 3, 1))
    for (w, b) in params:
        x = lax.conv_general_dilated(
            x, w, window_strides=(1, 1), padding="SAME",
            dimension_numbers=("NHWC", "HWIO", "NHWC")) + b
    return jnp.transpose(x, (0, 3, 1, 2))


if __name__ == "__main__":
    # batch=2, in_channels=4, spatial=16x16, num_filters=8, K=3, classes=4.
    in_channels, num_filters, kernel_size, num_classes = 4, 8, 3, 4
    key = jax.random.PRNGKey(0)
    key, kx = jax.random.split(key)
    x = jax.random.normal(kx, (2, in_channels, 16, 16), jnp.float32)

    params = init_params(key, in_channels, num_filters, kernel_size,
                         num_classes)

    out = jax.block_until_ready(iir_conv_net_forward(x, params))
    ref = reference_forward(x, params)

    assert out.shape == (2, num_classes, 16, 16), out.shape
    err = float(jnp.max(jnp.abs(out - ref)))
    assert jnp.allclose(out, ref, atol=1e-4, rtol=1e-4), err
    print("KERNEL_OK")
</pallas_src>

<mosaic_0001>
module attributes {stable_mosaic.version = 11 : i64} {
  func.func @_fused_convnet_kernel(%arg0: i32, %arg1: memref<1x8x256xf32, #tpu.memory_space<vmem>>, %arg2: memref<9x256xf32, #tpu.memory_space<vmem>>, %arg3: memref<8x72xf32, #tpu.memory_space<vmem>>, %arg4: memref<8x1xf32, #tpu.memory_space<vmem>>, %arg5: memref<8x72xf32, #tpu.memory_space<vmem>>, %arg6: memref<8x1xf32, #tpu.memory_space<vmem>>, %arg7: memref<8x72xf32, #tpu.memory_space<vmem>>, %arg8: memref<8x1xf32, #tpu.memory_space<vmem>>, %arg9: memref<8x72xf32, #tpu.memory_space<vmem>>, %arg10: memref<8x1xf32, #tpu.memory_space<vmem>>, %arg11: memref<4x72xf32, #tpu.memory_space<vmem>>, %arg12: memref<4x1xf32, #tpu.memory_space<vmem>>, %arg13: memref<1x4x256xf32, #tpu.memory_space<vmem>>) attributes {dimension_semantics = [#tpu.dimension_semantics<parallel>], iteration_bounds = array<i64: 2>, scalar_prefetch = 0 : i64, scratch_operands = 0 : i64, tpu.core_type = #tpu.core_type<tc>, window_params = [{transform_indices = @transform_0, window_bounds = array<i64: 1, 8, 256>}, {pipeline_mode = #tpu.pipeline_mode<synchronous>, transform_indices = @transform_1, window_bounds = array<i64: 9, 256>}, {pipeline_mode = #tpu.pipeline_mode<synchronous>, transform_indices = @transform_2, window_bounds = array<i64: 8, 72>}, {pipeline_mode = #tpu.pipeline_mode<synchronous>, transform_indices = @transform_3, window_bounds = array<i64: 8, 1>}, {pipeline_mode = #tpu.pipeline_mode<synchronous>, transform_indices = @transform_4, window_bounds = array<i64: 8, 72>}, {pipeline_mode = #tpu.pipeline_mode<synchronous>, transform_indices = @transform_5, window_bounds = array<i64: 8, 1>}, {pipeline_mode = #tpu.pipeline_mode<synchronous>, transform_indices = @transform_6, window_bounds = array<i64: 8, 72>}, {pipeline_mode = #tpu.pipeline_mode<synchronous>, transform_indices = @transform_7, window_bounds = array<i64: 8, 1>}, {pipeline_mode = #tpu.pipeline_mode<synchronous>, transform_indices = @transform_8, window_bounds = array<i64: 8, 72>}, {pipeline_mode = #tpu.pipeline_mode<synchronous>, transform_indices = @transform_9, window_bounds = array<i64: 8, 1>}, {pipeline_mode = #tpu.pipeline_mode<synchronous>, transform_indices = @transform_10, window_bounds = array<i64: 4, 72>}, {pipeline_mode = #tpu.pipeline_mode<synchronous>, transform_indices = @transform_11, window_bounds = array<i64: 4, 1>}, {transform_indices = @transform_12, window_bounds = array<i64: 1, 4, 256>}]} {
    %c0 = arith.constant 0 : index
    %c0_0 = arith.constant 0 : index
    %0 = vector.load %arg2[%c0, %c0_0] : memref<9x256xf32, #tpu.memory_space<vmem>>, vector<9x256xf32>
    %c0_1 = arith.constant 0 : index
    %c0_2 = arith.constant 0 : index
    %c0_3 = arith.constant 0 : index
    %1 = vector.load %arg1[%c0_1, %c0_2, %c0_3] : memref<1x8x256xf32, #tpu.memory_space<vmem>>, vector<1x8x256xf32>
    %2 = vector.shape_cast %1 : vector<1x8x256xf32> to vector<8x256xf32>
    %3 = vector.extract_strided_slice %2 {offsets = [0, 239], sizes = [8, 17], strides = [1, 1]} : vector<8x256xf32> to vector<8x17xf32>
    %4 = vector.extract_strided_slice %2 {offsets = [0, 0], sizes = [8, 239], strides = [1, 1]} : vector<8x256xf32> to vector<8x239xf32>
    %5 = tpu.concatenate %3, %4 in 1 : vector<8x17xf32>, vector<8x239xf32> -> vector<8x256xf32>
    %6 = vector.extract_strided_slice %0 {offsets = [0, 0], sizes = [1, 256], strides = [1, 1]} : vector<9x256xf32> to vector<1x256xf32>
    %7 = vector.shape_cast %6 : vector<1x256xf32> to vector<1x256xf32>
    %8 = vector.broadcast %7 : vector<1x256xf32> to vector<8x256xf32>
    %9 = arith.mulf %5, %8 : vector<8x256xf32>
    %10 = vector.extract_strided_slice %2 {offsets = [0, 240], sizes = [8, 16], strides = [1, 1]} : vector<8x256xf32> to vector<8x16xf32>
    %11 = vector.extract_strided_slice %2 {offsets = [0, 0], sizes = [8, 240], strides = [1, 1]} : vector<8x256xf32> to vector<8x240xf32>
    %12 = tpu.concatenate %10, %11 in 1 : vector<8x16xf32>, vector<8x240xf32> -> vector<8x256xf32>
    %13 = vector.extract_strided_slice %0 {offsets = [1, 0], sizes = [1, 256], strides = [1, 1]} : vector<9x256xf32> to vector<1x256xf32>
    %14 = vector.shape_cast %13 : vector<1x256xf32> to vector<1x256xf32>
    %15 = vector.broadcast %14 : vector<1x256xf32> to vector<8x256xf32>
    %16 = arith.mulf %12, %15 : vector<8x256xf32>
    %17 = vector.extract_strided_slice %2 {offsets = [0, 241], sizes = [8, 15], strides = [1, 1]} : vector<8x256xf32> to vector<8x15xf32>
    %18 = vector.extract_strided_slice %2 {offsets = [0, 0], sizes = [8, 241], strides = [1, 1]} : vector<8x256xf32> to vector<8x241xf32>
    %19 = tpu.concatenate %17, %18 in 1 : vector<8x15xf32>, vector<8x241xf32> -> vector<8x256xf32>
    %20 = vector.extract_strided_slice %0 {offsets = [2, 0], sizes = [1, 256], strides = [1, 1]} : vector<9x256xf32> to vector<1x256xf32>
    %21 = vector.shape_cast %20 : vector<1x256xf32> to vector<1x256xf32>
    %22 = vector.broadcast %21 : vector<1x256xf32> to vector<8x256xf32>
    %23 = arith.mulf %19, %22 : vector<8x256xf32>
    %24 = vector.extract_strided_slice %2 {offsets = [0, 255], sizes = [8, 1], strides = [1, 1]} : vector<8x256xf32> to vector<8x1xf32>
    %25 = vector.extract_strided_slice %2 {offsets = [0, 0], sizes = [8, 255], strides = [1, 1]} : vector<8x256xf32> to vector<8x255xf32>
    %26 = tpu.concatenate %24, %25 in 1 : vector<8x1xf32>, vector<8x255xf32> -> vector<8x256xf32>
    %27 = vector.extract_strided_slice %0 {offsets = [3, 0], sizes = [1, 256], strides = [1, 1]} : vector<9x256xf32> to vector<1x256xf32>
    %28 = vector.shape_cast %27 : vector<1x256xf32> to vector<1x256xf32>
    %29 = vector.broadcast %28 : vector<1x256xf32> to vector<8x256xf32>
    %30 = arith.mulf %26, %29 : vector<8x256xf32>
    %31 = vector.extract_strided_slice %2 {offsets = [0, 1], sizes = [8, 255], strides = [1, 1]} : vector<8x256xf32> to vector<8x255xf32>
    %32 = vector.extract_strided_slice %2 {offsets = [0, 0], sizes = [8, 1], strides = [1, 1]} : vector<8x256xf32> to vector<8x1xf32>
    %33 = tpu.concatenate %31, %32 in 1 : vector<8x255xf32>, vector<8x1xf32> -> vector<8x256xf32>
    %34 = vector.extract_strided_slice %0 {offsets = [5, 0], sizes = [1, 256], strides = [1, 1]} : vector<9x256xf32> to vector<1x256xf32>
    %35 = vector.shape_cast %34 : vector<1x256xf32> to vector<1x256xf32>
    %36 = vector.broadcast %35 : vector<1x256xf32> to vector<8x256xf32>
    %37 = arith.mulf %33, %36 : vector<8x256xf32>
    %38 = vector.extract_strided_slice %2 {offsets = [0, 15], sizes = [8, 241], strides = [1, 1]} : vector<8x256xf32> to vector<8x241xf32>
    %39 = vector.extract_strided_slice %2 {offsets = [0, 0], sizes = [8, 15], strides = [1, 1]} : vector<8x256xf32> to vector<8x15xf32>
    %40 = tpu.concatenate %38, %39 in 1 : vector<8x241xf32>, vector<8x15xf32> -> vector<8x256xf32>
    %41 = vector.extract_strided_slice %0 {offsets = [6, 0], sizes = [1, 256], strides = [1, 1]} : vector<9x256xf32> to vector<1x256xf32>
    %42 = vector.shape_cast %41 : vector<1x256xf32> to vector<1x256xf32>
    %43 = vector.broadcast %42 : vector<1x256xf32> to vector<8x256xf32>
    %44 = arith.mulf %40, %43 : vector<8x256xf32>
    %45 = vector.extract_strided_slice %2 {offsets = [0, 16], sizes = [8, 240], strides = [1, 1]} : vector<8x256xf32> to vector<8x240xf32>
    %46 = vector.extract_strided_slice %2 {offsets = [0, 0], sizes = [8, 16], strides = [1, 1]} : vector<8x256xf32> to vector<8x16xf32>
    %47 = tpu.concatenate %45, %46 in 1 : vector<8x240xf32>, vector<8x16xf32> -> vector<8x256xf32>
    %48 = vector.extract_strided_slice %0 {offsets = [7, 0], sizes = [1, 256], strides = [1, 1]} : vector<9x256xf32> to vector<1x256xf32>
    %49 = vector.shape_cast %48 : vector<1x256xf32> to vector<1x256xf32>
    %50 = vector.broadcast %49 : vector<1x256xf32> to vector<8x256xf32>
    %51 = arith.mulf %47, %50 : vector<8x256xf32>
    %52 = vector.extract_strided_slice %2 {offsets = [0, 17], sizes = [8, 239], strides = [1, 1]} : vector<8x256xf32> to vector<8x239xf32>
    %53 = vector.extract_strided_slice %2 {offsets = [0, 0], sizes = [8, 17], strides = [1, 1]} : vector<8x256xf32> to vector<8x17xf32>
    %54 = tpu.concatenate %52, %53 in 1 : vector<8x239xf32>, vector<8x17xf32> -> vector<8x256xf32>
    %55 = vector.extract_strided_slice %0 {offsets = [8, 0], sizes = [1, 256], strides = [1, 1]} : vector<9x256xf32> to vector<1x256xf32>
    %56 = vector.shape_cast %55 : vector<1x256xf32> to vector<1x256xf32>
    %57 = vector.broadcast %56 : vector<1x256xf32> to vector<8x256xf32>
    %58 = arith.mulf %54, %57 : vector<8x256xf32>
    %59 = tpu.concatenate %9, %16, %23, %30, %2, %37, %44, %51, %58 in 0 : vector<8x256xf32>, vector<8x256xf32>, vector<8x256xf32>, vector<8x256xf32>, vector<8x256xf32>, vector<8x256xf32>, vector<8x256xf32>, vector<8x256xf32>, vector<8x256xf32> -> vector<72x256xf32>
    %c0_4 = arith.constant 0 : index
    %c0_5 = arith.constant 0 : index
    %60 = vector.load %arg3[%c0_4, %c0_5] : memref<8x72xf32, #tpu.memory_space<vmem>>, vector<8x72xf32>
    %cst = arith.constant dense<0.000000e+00> : vector<8x256xf32>
    %61 = tpu.matmul %60, %59, %cst {dimension_numbers = #tpu.dot_dimension_numbers<[1], [0], [0], [1], [0, 0, 1, 1], [], []>} : vector<8x72xf32>, vector<72x256xf32>, vector<8x256xf32> -> vector<8x256xf32>
    %c0_6 = arith.constant 0 : index
    %c0_7 = arith.constant 0 : index
    %62 = vector.load %arg4[%c0_6, %c0_7] : memref<8x1xf32, #tpu.memory_space<vmem>>, vector<8x1xf32>
    %63 = vector.broadcast %62 : vector<8x1xf32> to vector<8x256xf32>
    %64 = arith.addf %61, %63 : vector<8x256xf32>
    %65 = vector.extract_strided_slice %64 {offsets = [0, 239], sizes = [8, 17], strides = [1, 1]} : vector<8x256xf32> to vector<8x17xf32>
    %66 = vector.extract_strided_slice %64 {offsets = [0, 0], sizes = [8, 239], strides = [1, 1]} : vector<8x256xf32> to vector<8x239xf32>
    %67 = tpu.concatenate %65, %66 in 1 : vector<8x17xf32>, vector<8x239xf32> -> vector<8x256xf32>
    %68 = arith.mulf %67, %8 : vector<8x256xf32>
    %69 = vector.extract_strided_slice %64 {offsets = [0, 240], sizes = [8, 16], strides = [1, 1]} : vector<8x256xf32> to vector<8x16xf32>
    %70 = vector.extract_strided_slice %64 {offsets = [0, 0], sizes = [8, 240], strides = [1, 1]} : vector<8x256xf32> to vector<8x240xf32>
    %71 = tpu.concatenate %69, %70 in 1 : vector<8x16xf32>, vector<8x240xf32> -> vector<8x256xf32>
    %72 = arith.mulf %71, %15 : vector<8x256xf32>
    %73 = vector.extract_strided_slice %64 {offsets = [0, 241], sizes = [8, 15], strides = [1, 1]} : vector<8x256xf32> to vector<8x15xf32>
    %74 = vector.extract_strided_slice %64 {offsets = [0, 0], sizes = [8, 241], strides = [1, 1]} : vector<8x256xf32> to vector<8x241xf32>
    %75 = tpu.concatenate %73, %74 in 1 : vector<8x15xf32>, vector<8x241xf32> -> vector<8x256xf32>
    %76 = arith.mulf %75, %22 : vector<8x256xf32>
    %77 = vector.extract_strided_slice %64 {offsets = [0, 255], sizes = [8, 1], strides = [1, 1]} : vector<8x256xf32> to vector<8x1xf32>
    %78 = vector.extract_strided_slice %64 {offsets = [0, 0], sizes = [8, 255], strides = [1, 1]} : vector<8x256xf32> to vector<8x255xf32>
    %79 = tpu.concatenate %77, %78 in 1 : vector<8x1xf32>, vector<8x255xf32> -> vector<8x256xf32>
    %80 = arith.mulf %79, %29 : vector<8x256xf32>
    %81 = vector.extract_strided_slice %64 {offsets = [0, 1], sizes = [8, 255], strides = [1, 1]} : vector<8x256xf32> to vector<8x255xf32>
    %82 = vector.extract_strided_slice %64 {offsets = [0, 0], sizes = [8, 1], strides = [1, 1]} : vector<8x256xf32> to vector<8x1xf32>
    %83 = tpu.concatenate %81, %82 in 1 : vector<8x255xf32>, vector<8x1xf32> -> vector<8x256xf32>
    %84 = arith.mulf %83, %36 : vector<8x256xf32>
    %85 = vector.extract_strided_slice %64 {offsets = [0, 15], sizes = [8, 241], strides = [1, 1]} : vector<8x256xf32> to vector<8x241xf32>
    %86 = vector.extract_strided_slice %64 {offsets = [0, 0], sizes = [8, 15], strides = [1, 1]} : vector<8x256xf32> to vector<8x15xf32>
    %87 = tpu.concatenate %85, %86 in 1 : vector<8x241xf32>, vector<8x15xf32> -> vector<8x256xf32>
    %88 = arith.mulf %87, %43 : vector<8x256xf32>
    %89 = vector.extract_strided_slice %64 {offsets = [0, 16], sizes = [8, 240], strides = [1, 1]} : vector<8x256xf32> to vector<8x240xf32>
    %90 = vector.extract_strided_slice %64 {offsets = [0, 0], sizes = [8, 16], strides = [1, 1]} : vector<8x256xf32> to vector<8x16xf32>
    %91 = tpu.concatenate %89, %90 in 1 : vector<8x240xf32>, vector<8x16xf32> -> vector<8x256xf32>
    %92 = arith.mulf %91, %50 : vector<8x256xf32>
    %93 = vector.extract_strided_slice %64 {offsets = [0, 17], sizes = [8, 239], strides = [1, 1]} : vector<8x256xf32> to vector<8x239xf32>
    %94 = vector.extract_strided_slice %64 {offsets = [0, 0], sizes = [8, 17], strides = [1, 1]} : vector<8x256xf32> to vector<8x17xf32>
    %95 = tpu.concatenate %93, %94 in 1 : vector<8x239xf32>, vector<8x17xf32> -> vector<8x256xf32>
    %96 = arith.mulf %95, %57 : vector<8x256xf32>
    %97 = tpu.concatenate %68, %72, %76, %80, %64, %84, %88, %92, %96 in 0 : vector<8x256xf32>, vector<8x256xf32>, vector<8x256xf32>, vector<8x256xf32>, vector<8x256xf32>, vector<8x256xf32>, vector<8x256xf32>, vector<8x256xf32>, vector<8x256xf32> -> vector<72x256xf32>
    %c0_8 = arith.constant 0 : index
    %c0_9 = arith.constant 0 : index
    %98 = vector.load %arg5[%c0_8, %c0_9] : memref<8x72xf32, #tpu.memory_space<vmem>>, vector<8x72xf32>
    %cst_10 = arith.constant dense<0.000000e+00> : vector<8x256xf32>
    %99 = tpu.matmul %98, %97, %cst_10 {dimension_numbers = #tpu.dot_dimension_numbers<[1], [0], [0], [1], [0, 0, 1, 1], [], []>} : vector<8x72xf32>, vector<72x256xf32>, vector<8x256xf32> -> vector<8x256xf32>
    %c0_11 = arith.constant 0 : index
    %c0_12 = arith.constant 0 : index
    %100 = vector.load %arg6[%c0_11, %c0_12] : memref<8x1xf32, #tpu.memory_space<vmem>>, vector<8x1xf32>
    %101 = vector.broadcast %100 : vector<8x1xf32> to vector<8x256xf32>
    %102 = arith.addf %99, %101 : vector<8x256xf32>
    %103 = vector.extract_strided_slice %102 {offsets = [0, 239], sizes = [8, 17], strides = [1, 1]} : vector<8x256xf32> to vector<8x17xf32>
    %104 = vector.extract_strided_slice %102 {offsets = [0, 0], sizes = [8, 239], strides = [1, 1]} : vector<8x256xf32> to vector<8x239xf32>
    %105 = tpu.concatenate %103, %104 in 1 : vector<8x17xf32>, vector<8x239xf32> -> vector<8x256xf32>
    %106 = arith.mulf %105, %8 : vector<8x256xf32>
    %107 = vector.extract_strided_slice %102 {offsets = [0, 240], sizes = [8, 16], strides = [1, 1]} : vector<8x256xf32> to vector<8x16xf32>
    %108 = vector.extract_strided_slice %102 {offsets = [0, 0], sizes = [8, 240], strides = [1, 1]} : vector<8x256xf32> to vector<8x240xf32>
    %109 = tpu.concatenate %107, %108 in 1 : vector<8x16xf32>, vector<8x240xf32> -> vector<8x256xf32>
    %110 = arith.mulf %109, %15 : vector<8x256xf32>
    %111 = vector.extract_strided_slice %102 {offsets = [0, 241], sizes = [8, 15], strides = [1, 1]} : vector<8x256xf32> to vector<8x15xf32>
    %112 = vector.extract_strided_slice %102 {offsets = [0, 0], sizes = [8, 241], strides = [1, 1]} : vector<8x256xf32> to vector<8x241xf32>
    %113 = tpu.concatenate %111, %112 in 1 : vector<8x15xf32>, vector<8x241xf32> -> vector<8x256xf32>
    %114 = arith.mulf %113, %22 : vector<8x256xf32>
    %115 = vector.extract_strided_slice %102 {offsets = [0, 255], sizes = [8, 1], strides = [1, 1]} : vector<8x256xf32> to vector<8x1xf32>
    %116 = vector.extract_strided_slice %102 {offsets = [0, 0], sizes = [8, 255], strides = [1, 1]} : vector<8x256xf32> to vector<8x255xf32>
    %117 = tpu.concatenate %115, %116 in 1 : vector<8x1xf32>, vector<8x255xf32> -> vector<8x256xf32>
    %118 = arith.mulf %117, %29 : vector<8x256xf32>
    %119 = vector.extract_strided_slice %102 {offsets = [0, 1], sizes = [8, 255], strides = [1, 1]} : vector<8x256xf32> to vector<8x255xf32>
    %120 = vector.extract_strided_slice %102 {offsets = [0, 0], sizes = [8, 1], strides = [1, 1]} : vector<8x256xf32> to vector<8x1xf32>
    %121 = tpu.concatenate %119, %120 in 1 : vector<8x255xf32>, vector<8x1xf32> -> vector<8x256xf32>
    %122 = arith.mulf %121, %36 : vector<8x256xf32>
    %123 = vector.extract_strided_slice %102 {offsets = [0, 15], sizes = [8, 241], strides = [1, 1]} : vector<8x256xf32> to vector<8x241xf32>
    %124 = vector.extract_strided_slice %102 {offsets = [0, 0], sizes = [8, 15], strides = [1, 1]} : vector<8x256xf32> to vector<8x15xf32>
    %125 = tpu.concatenate %123, %124 in 1 : vector<8x241xf32>, vector<8x15xf32> -> vector<8x256xf32>
    %126 = arith.mulf %125, %43 : vector<8x256xf32>
    %127 = vector.extract_strided_slice %102 {offsets = [0, 16], sizes = [8, 240], strides = [1, 1]} : vector<8x256xf32> to vector<8x240xf32>
    %128 = vector.extract_strided_slice %102 {offsets = [0, 0], sizes = [8, 16], strides = [1, 1]} : vector<8x256xf32> to vector<8x16xf32>
    %129 = tpu.concatenate %127, %128 in 1 : vector<8x240xf32>, vector<8x16xf32> -> vector<8x256xf32>
    %130 = arith.mulf %129, %50 : vector<8x256xf32>
    %131 = vector.extract_strided_slice %102 {offsets = [0, 17], sizes = [8, 239], strides = [1, 1]} : vector<8x256xf32> to vector<8x239xf32>
    %132 = vector.extract_strided_slice %102 {offsets = [0, 0], sizes = [8, 17], strides = [1, 1]} : vector<8x256xf32> to vector<8x17xf32>
    %133 = tpu.concatenate %131, %132 in 1 : vector<8x239xf32>, vector<8x17xf32> -> vector<8x256xf32>
    %134 = arith.mulf %133, %57 : vector<8x256xf32>
    %135 = tpu.concatenate %106, %110, %114, %118, %102, %122, %126, %130, %134 in 0 : vector<8x256xf32>, vector<8x256xf32>, vector<8x256xf32>, vector<8x256xf32>, vector<8x256xf32>, vector<8x256xf32>, vector<8x256xf32>, vector<8x256xf32>, vector<8x256xf32> -> vector<72x256xf32>
    %c0_13 = arith.constant 0 : index
    %c0_14 = arith.constant 0 : index
    %136 = vector.load %arg7[%c0_13, %c0_14] : memref<8x72xf32, #tpu.memory_space<vmem>>, vector<8x72xf32>
    %cst_15 = arith.constant dense<0.000000e+00> : vector<8x256xf32>
    %137 = tpu.matmul %136, %135, %cst_15 {dimension_numbers = #tpu.dot_dimension_numbers<[1], [0], [0], [1], [0, 0, 1, 1], [], []>} : vector<8x72xf32>, vector<72x256xf32>, vector<8x256xf32> -> vector<8x256xf32>
    %c0_16 = arith.constant 0 : index
    %c0_17 = arith.constant 0 : index
    %138 = vector.load %arg8[%c0_16, %c0_17] : memref<8x1xf32, #tpu.memory_space<vmem>>, vector<8x1xf32>
    %139 = vector.broadcast %138 : vector<8x1xf32> to vector<8x256xf32>
    %140 = arith.addf %137, %139 : vector<8x256xf32>
    %141 = vector.extract_strided_slice %140 {offsets = [0, 239], sizes = [8, 17], strides = [1, 1]} : vector<8x256xf32> to vector<8x17xf32>
    %142 = vector.extract_strided_slice %140 {offsets = [0, 0], sizes = [8, 239], strides = [1, 1]} : vector<8x256xf32> to vector<8x239xf32>
    %143 = tpu.concatenate %141, %142 in 1 : vector<8x17xf32>, vector<8x239xf32> -> vector<8x256xf32>
    %144 = arith.mulf %143, %8 : vector<8x256xf32>
    %145 = vector.extract_strided_slice %140 {offsets = [0, 240], sizes = [8, 16], strides = [1, 1]} : vector<8x256xf32> to vector<8x16xf32>
    %146 = vector.extract_strided_slice %140 {offsets = [0, 0], sizes = [8, 240], strides = [1, 1]} : vector<8x256xf32> to vector<8x240xf32>
    %147 = tpu.concatenate %145, %146 in 1 : vector<8x16xf32>, vector<8x240xf32> -> vector<8x256xf32>
    %148 = arith.mulf %147, %15 : vector<8x256xf32>
    %149 = vector.extract_strided_slice %140 {offsets = [0, 241], sizes = [8, 15], strides = [1, 1]} : vector<8x256xf32> to vector<8x15xf32>
    %150 = vector.extract_strided_slice %140 {offsets = [0, 0], sizes = [8, 241], strides = [1, 1]} : vector<8x256xf32> to vector<8x241xf32>
    %151 = tpu.concatenate %149, %150 in 1 : vector<8x15xf32>, vector<8x241xf32> -> vector<8x256xf32>
    %152 = arith.mulf %151, %22 : vector<8x256xf32>
    %153 = vector.extract_strided_slice %140 {offsets = [0, 255], sizes = [8, 1], strides = [1, 1]} : vector<8x256xf32> to vector<8x1xf32>
    %154 = vector.extract_strided_slice %140 {offsets = [0, 0], sizes = [8, 255], strides = [1, 1]} : vector<8x256xf32> to vector<8x255xf32>
    %155 = tpu.concatenate %153, %154 in 1 : vector<8x1xf32>, vector<8x255xf32> -> vector<8x256xf32>
    %156 = arith.mulf %155, %29 : vector<8x256xf32>
    %157 = vector.extract_strided_slice %140 {offsets = [0, 1], sizes = [8, 255], strides = [1, 1]} : vector<8x256xf32> to vector<8x255xf32>
    %158 = vector.extract_strided_slice %140 {offsets = [0, 0], sizes = [8, 1], strides = [1, 1]} : vector<8x256xf32> to vector<8x1xf32>
    %159 = tpu.concatenate %157, %158 in 1 : vector<8x255xf32>, vector<8x1xf32> -> vector<8x256xf32>
    %160 = arith.mulf %159, %36 : vector<8x256xf32>
    %161 = vector.extract_strided_slice %140 {offsets = [0, 15], sizes = [8, 241], strides = [1, 1]} : vector<8x256xf32> to vector<8x241xf32>
    %162 = vector.extract_strided_slice %140 {offsets = [0, 0], sizes = [8, 15], strides = [1, 1]} : vector<8x256xf32> to vector<8x15xf32>
    %163 = tpu.concatenate %161, %162 in 1 : vector<8x241xf32>, vector<8x15xf32> -> vector<8x256xf32>
    %164 = arith.mulf %163, %43 : vector<8x256xf32>
    %165 = vector.extract_strided_slice %140 {offsets = [0, 16], sizes = [8, 240], strides = [1, 1]} : vector<8x256xf32> to vector<8x240xf32>
    %166 = vector.extract_strided_slice %140 {offsets = [0, 0], sizes = [8, 16], strides = [1, 1]} : vector<8x256xf32> to vector<8x16xf32>
    %167 = tpu.concatenate %165, %166 in 1 : vector<8x240xf32>, vector<8x16xf32> -> vector<8x256xf32>
    %168 = arith.mulf %167, %50 : vector<8x256xf32>
    %169 = vector.extract_strided_slice %140 {offsets = [0, 17], sizes = [8, 239], strides = [1, 1]} : vector<8x256xf32> to vector<8x239xf32>
    %170 = vector.extract_strided_slice %140 {offsets = [0, 0], sizes = [8, 17], strides = [1, 1]} : vector<8x256xf32> to vector<8x17xf32>
    %171 = tpu.concatenate %169, %170 in 1 : vector<8x239xf32>, vector<8x17xf32> -> vector<8x256xf32>
    %172 = arith.mulf %171, %57 : vector<8x256xf32>
    %173 = tpu.concatenate %144, %148, %152, %156, %140, %160, %164, %168, %172 in 0 : vector<8x256xf32>, vector<8x256xf32>, vector<8x256xf32>, vector<8x256xf32>, vector<8x256xf32>, vector<8x256xf32>, vector<8x256xf32>, vector<8x256xf32>, vector<8x256xf32> -> vector<72x256xf32>
    %c0_18 = arith.constant 0 : index
    %c0_19 = arith.constant 0 : index
    %174 = vector.load %arg9[%c0_18, %c0_19] : memref<8x72xf32, #tpu.memory_space<vmem>>, vector<8x72xf32>
    %cst_20 = arith.constant dense<0.000000e+00> : vector<8x256xf32>
    %175 = tpu.matmul %174, %173, %cst_20 {dimension_numbers = #tpu.dot_dimension_numbers<[1], [0], [0], [1], [0, 0, 1, 1], [], []>} : vector<8x72xf32>, vector<72x256xf32>, vector<8x256xf32> -> vector<8x256xf32>
    %c0_21 = arith.constant 0 : index
    %c0_22 = arith.constant 0 : index
    %176 = vector.load %arg10[%c0_21, %c0_22] : memref<8x1xf32, #tpu.memory_space<vmem>>, vector<8x1xf32>
    %177 = vector.broadcast %176 : vector<8x1xf32> to vector<8x256xf32>
    %178 = arith.addf %175, %177 : vector<8x256xf32>
    %179 = vector.extract_strided_slice %178 {offsets = [0, 239], sizes = [8, 17], strides = [1, 1]} : vector<8x256xf32> to vector<8x17xf32>
    %180 = vector.extract_strided_slice %178 {offsets = [0, 0], sizes = [8, 239], strides = [1, 1]} : vector<8x256xf32> to vector<8x239xf32>
    %181 = tpu.concatenate %179, %180 in 1 : vector<8x17xf32>, vector<8x239xf32> -> vector<8x256xf32>
    %182 = arith.mulf %181, %8 : vector<8x256xf32>
    %183 = vector.extract_strided_slice %178 {offsets = [0, 240], sizes = [8, 16], strides = [1, 1]} : vector<8x256xf32> to vector<8x16xf32>
    %184 = vector.extract_strided_slice %178 {offsets = [0, 0], sizes = [8, 240], strides = [1, 1]} : vector<8x256xf32> to vector<8x240xf32>
    %185 = tpu.concatenate %183, %184 in 1 : vector<8x16xf32>, vector<8x240xf32> -> vector<8x256xf32>
    %186 = arith.mulf %185, %15 : vector<8x256xf32>
    %187 = vector.extract_strided_slice %178 {offsets = [0, 241], sizes = [8, 15], strides = [1, 1]} : vector<8x256xf32> to vector<8x15xf32>
    %188 = vector.extract_strided_slice %178 {offsets = [0, 0], sizes = [8, 241], strides = [1, 1]} : vector<8x256xf32> to vector<8x241xf32>
    %189 = tpu.concatenate %187, %188 in 1 : vector<8x15xf32>, vector<8x241xf32> -> vector<8x256xf32>
    %190 = arith.mulf %189, %22 : vector<8x256xf32>
    %191 = vector.extract_strided_slice %178 {offsets = [0, 255], sizes = [8, 1], strides = [1, 1]} : vector<8x256xf32> to vector<8x1xf32>
    %192 = vector.extract_strided_slice %178 {offsets = [0, 0], sizes = [8, 255], strides = [1, 1]} : vector<8x256xf32> to vector<8x255xf32>
    %193 = tpu.concatenate %191, %192 in 1 : vector<8x1xf32>, vector<8x255xf32> -> vector<8x256xf32>
    %194 = arith.mulf %193, %29 : vector<8x256xf32>
    %195 = vector.extract_strided_slice %178 {offsets = [0, 1], sizes = [8, 255], strides = [1, 1]} : vector<8x256xf32> to vector<8x255xf32>
    %196 = vector.extract_strided_slice %178 {offsets = [0, 0], sizes = [8, 1], strides = [1, 1]} : vector<8x256xf32> to vector<8x1xf32>
    %197 = tpu.concatenate %195, %196 in 1 : vector<8x255xf32>, vector<8x1xf32> -> vector<8x256xf32>
    %198 = arith.mulf %197, %36 : vector<8x256xf32>
    %199 = vector.extract_strided_slice %178 {offsets = [0, 15], sizes = [8, 241], strides = [1, 1]} : vector<8x256xf32> to vector<8x241xf32>
    %200 = vector.extract_strided_slice %178 {offsets = [0, 0], sizes = [8, 15], strides = [1, 1]} : vector<8x256xf32> to vector<8x15xf32>
    %201 = tpu.concatenate %199, %200 in 1 : vector<8x241xf32>, vector<8x15xf32> -> vector<8x256xf32>
    %202 = arith.mulf %201, %43 : vector<8x256xf32>
    %203 = vector.extract_strided_slice %178 {offsets = [0, 16], sizes = [8, 240], strides = [1, 1]} : vector<8x256xf32> to vector<8x240xf32>
    %204 = vector.extract_strided_slice %178 {offsets = [0, 0], sizes = [8, 16], strides = [1, 1]} : vector<8x256xf32> to vector<8x16xf32>
    %205 = tpu.concatenate %203, %204 in 1 : vector<8x240xf32>, vector<8x16xf32> -> vector<8x256xf32>
    %206 = arith.mulf %205, %50 : vector<8x256xf32>
    %207 = vector.extract_strided_slice %178 {offsets = [0, 17], sizes = [8, 239], strides = [1, 1]} : vector<8x256xf32> to vector<8x239xf32>
    %208 = vector.extract_strided_slice %178 {offsets = [0, 0], sizes = [8, 17], strides = [1, 1]} : vector<8x256xf32> to vector<8x17xf32>
    %209 = tpu.concatenate %207, %208 in 1 : vector<8x239xf32>, vector<8x17xf32> -> vector<8x256xf32>
    %210 = arith.mulf %209, %57 : vector<8x256xf32>
    %211 = tpu.concatenate %182, %186, %190, %194, %178, %198, %202, %206, %210 in 0 : vector<8x256xf32>, vector<8x256xf32>, vector<8x256xf32>, vector<8x256xf32>, vector<8x256xf32>, vector<8x256xf32>, vector<8x256xf32>, vector<8x256xf32>, vector<8x256xf32> -> vector<72x256xf32>
    %c0_23 = arith.constant 0 : index
    %c0_24 = arith.constant 0 : index
    %212 = vector.load %arg11[%c0_23, %c0_24] : memref<4x72xf32, #tpu.memory_space<vmem>>, vector<4x72xf32>
    %cst_25 = arith.constant dense<0.000000e+00> : vector<4x256xf32>
    %213 = tpu.matmul %212, %211, %cst_25 {dimension_numbers = #tpu.dot_dimension_numbers<[1], [0], [0], [1], [0, 0, 1, 1], [], []>} : vector<4x72xf32>, vector<72x256xf32>, vector<4x256xf32> -> vector<4x256xf32>
    %c0_26 = arith.constant 0 : index
    %c0_27 = arith.constant 0 : index
    %214 = vector.load %arg12[%c0_26, %c0_27] : memref<4x1xf32, #tpu.memory_space<vmem>>, vector<4x1xf32>
    %215 = vector.broadcast %214 : vector<4x1xf32> to vector<4x256xf32>
    %216 = arith.addf %213, %215 : vector<4x256xf32>
    %c0_28 = arith.constant 0 : index
    %c0_29 = arith.constant 0 : index
    %c0_30 = arith.constant 0 : index
    %217 = vector.load %arg13[%c0_28, %c0_29, %c0_30] : memref<1x4x256xf32, #tpu.memory_space<vmem>>, vector<1x4x256xf32>
    %218 = vector.shape_cast %217 : vector<1x4x256xf32> to vector<4x256xf32>
    %219 = vector.shape_cast %216 : vector<4x256xf32> to vector<1x4x256xf32>
    tpu.vector_store %arg13[%c0_28, %c0_29, %c0_30], %219 {strides = array<i32>} : memref<1x4x256xf32, #tpu.memory_space<vmem>>, vector<1x4x256xf32>,
    return
  }
  func.func @transform_0(%arg0: i32) -> (i32, i32, i32) {
    %c0_i32 = arith.constant 0 : i32
    %c0_i32_0 = arith.constant 0 : i32
    %c0_i32_1 = arith.constant 0 : i32
    return %arg0, %c0_i32, %c0_i32_0 : i32, i32, i32
  }
  func.func @transform_1(%arg0: i32) -> (i32, i32) {
    %c0_i32 = arith.constant 0 : i32
    %c0_i32_0 = arith.constant 0 : i32
    %c0_i32_1 = arith.constant 0 : i32
    return %c0_i32, %c0_i32_0 : i32, i32
  }
  func.func @transform_2(%arg0: i32) -> (i32, i32) {
    %c0_i32 = arith.constant 0 : i32
    %c0_i32_0 = arith.constant 0 : i32
    %c0_i32_1 = arith.constant 0 : i32
    return %c0_i32, %c0_i32_0 : i32, i32
  }
  func.func @transform_3(%arg0: i32) -> (i32, i32) {
    %c0_i32 = arith.constant 0 : i32
    %c0_i32_0 = arith.constant 0 : i32
    %c0_i32_1 = arith.constant 0 : i32
    return %c0_i32, %c0_i32_0 : i32, i32
  }
  func.func @transform_4(%arg0: i32) -> (i32, i32) {
    %c0_i32 = arith.constant 0 : i32
    %c0_i32_0 = arith.constant 0 : i32
    %c0_i32_1 = arith.constant 0 : i32
    return %c0_i32, %c0_i32_0 : i32, i32
  }
  func.func @transform_5(%arg0: i32) -> (i32, i32) {
    %c0_i32 = arith.constant 0 : i32
    %c0_i32_0 = arith.constant 0 : i32
    %c0_i32_1 = arith.constant 0 : i32
    return %c0_i32, %c0_i32_0 : i32, i32
  }
  func.func @transform_6(%arg0: i32) -> (i32, i32) {
    %c0_i32 = arith.constant 0 : i32
    %c0_i32_0 = arith.constant 0 : i32
    %c0_i32_1 = arith.constant 0 : i32
    return %c0_i32, %c0_i32_0 : i32, i32
  }
  func.func @transform_7(%arg0: i32) -> (i32, i32) {
    %c0_i32 = arith.constant 0 : i32
    %c0_i32_0 = arith.constant 0 : i32
    %c0_i32_1 = arith.constant 0 : i32
    return %c0_i32, %c0_i32_0 : i32, i32
  }
  func.func @transform_8(%arg0: i32) -> (i32, i32) {
    %c0_i32 = arith.constant 0 : i32
    %c0_i32_0 = arith.constant 0 : i32
    %c0_i32_1 = arith.constant 0 : i32
    return %c0_i32, %c0_i32_0 : i32, i32
  }
  func.func @transform_9(%arg0: i32) -> (i32, i32) {
    %c0_i32 = arith.constant 0 : i32
    %c0_i32_0 = arith.constant 0 : i32
    %c0_i32_1 = arith.constant 0 : i32
    return %c0_i32, %c0_i32_0 : i32, i32
  }
  func.func @transform_10(%arg0: i32) -> (i32, i32) {
    %c0_i32 = arith.constant 0 : i32
    %c0_i32_0 = arith.constant 0 : i32
    %c0_i32_1 = arith.constant 0 : i32
    return %c0_i32, %c0_i32_0 : i32, i32
  }
  func.func @transform_11(%arg0: i32) -> (i32, i32) {
    %c0_i32 = arith.constant 0 : i32
    %c0_i32_0 = arith.constant 0 : i32
    %c0_i32_1 = arith.constant 0 : i32
    return %c0_i32, %c0_i32_0 : i32, i32
  }
  func.func @transform_12(%arg0: i32) -> (i32, i32, i32) {
    %c0_i32 = arith.constant 0 : i32
    %c0_i32_0 = arith.constant 0 : i32
    %c0_i32_1 = arith.constant 0 : i32
    return %arg0, %c0_i32, %c0_i32_0 : i32, i32, i32
  }
}

</mosaic_0001>

<llo_original>
// kernel: iir_conv_net_forward.1
$region0: #{iir_conv_net_forward.1}
  #allocation0 [shape = 'u32[]', space=smem, size = 0x4, offset = 0x4, fixed_abs, tag = 'smem constant byte address 0x4 - core index']
  #allocation1 [shape = 'u32[144,128]{1,0:T(1,128)}', space=vmem, size = 0x12000, scoped, tag = 'internal scratch']
  %s0 = inlined_call_operand.vmem [shape: f32[2,8,256], index: 0, kind: input, shape index: {}]
  %s1 = inlined_call_operand.vmem [shape: f32[9,256], index: 1, kind: input, shape index: {}]
  %s2 = inlined_call_operand.vmem [shape: f32[8,72], index: 2, kind: input, shape index: {}]
  %s3 = inlined_call_operand.vmem [shape: f32[8,1], index: 3, kind: input, shape index: {}]
  %s4 = inlined_call_operand.vmem [shape: f32[8,72], index: 4, kind: input, shape index: {}]
  %s5 = inlined_call_operand.vmem [shape: f32[8,1], index: 5, kind: input, shape index: {}]
  %s6 = inlined_call_operand.vmem [shape: f32[8,72], index: 6, kind: input, shape index: {}]
  %s7 = inlined_call_operand.vmem [shape: f32[8,1], index: 7, kind: input, shape index: {}]
  %s8 = inlined_call_operand.vmem [shape: f32[8,72], index: 8, kind: input, shape index: {}]
  %s9 = inlined_call_operand.vmem [shape: f32[8,1], index: 9, kind: input, shape index: {}]
  %s10 = inlined_call_operand.vmem [shape: f32[4,72], index: 10, kind: input, shape index: {}]
  %s11 = inlined_call_operand.vmem [shape: f32[4,1], index: 11, kind: input, shape index: {}]
  %s12 = inlined_call_operand.vmem [shape: f32[2,4,256], index: 12, kind: output, shape index: {}]
  %s13 = sld [smem:[#allocation0]]
  $region81: #{iir_conv_net_forward.1} parent=0
    _
  %s15 = ssub.s32 1, %s13
  %s16 = scalar_select 0, %s15, %s13
  loop: start=0, step=1, limit=4
  $region2: #{iir_conv_net_forward.1} parent=0 // loop_pre_header
    _
  $region3: #{iir_conv_net_forward.1} parent=0 // loop_header
    %s18 = sphi 0, %s22
    %p19 = scmp.ge.s32.totalorder %s18, 4
    %s28 = sphi 0, %s30
    %s31 = sphi 0, %s28
    %s32 = sphi 0, %s31
    %s48 = sphi 0, %s32
    %s52 = sphi 0, %s52
    %s54 = sphi 0, %s52
    %s55 = sphi 0, %s54
    %s69 = sphi 0, %s55
    %s73 = sphi 0, %s73
    %s75 = sphi 0, %s73
    %s76 = sphi 0, %s75
    %s90 = sphi 0, %s76
    %s94 = sphi 0, %s94
    %s96 = sphi 0, %s94
    %s97 = sphi 0, %s96
    %s111 = sphi 0, %s97
    %s115 = sphi 0, %s115
    %s117 = sphi 0, %s115
    %s118 = sphi 0, %s117
    %s132 = sphi 0, %s118
    %s136 = sphi 0, %s136
    %s138 = sphi 0, %s136
    %s139 = sphi 0, %s138
    %s153 = sphi 0, %s139
    %s157 = sphi 0, %s157
    %s159 = sphi 0, %s157
    %s160 = sphi 0, %s159
    %s174 = sphi 0, %s160
    %s178 = sphi 0, %s178
    %s180 = sphi 0, %s178
    %s181 = sphi 0, %s180
    %s195 = sphi 0, %s181
    %s199 = sphi 0, %s199
    %s201 = sphi 0, %s199
    %s202 = sphi 0, %s201
    %s216 = sphi 0, %s202
    %s220 = sphi 0, %s220
    %s222 = sphi 0, %s220
    %s223 = sphi 0, %s222
    %s237 = sphi 0, %s223
    %s241 = sphi 0, %s241
    %s243 = sphi 0, %s241
    %s244 = sphi 0, %s243
    %s258 = sphi 0, %s244
    %s262 = sphi 0, %s262
    %s264 = sphi 0, %s262
    %s265 = sphi 0, %s264
    %s279 = sphi 0, %s265
    %s285 = sphi 0, %s287
    %s288 = sphi 0, %s285
    %s289 = sphi 0, %s288
    %s305 = sphi 0, %s289
  $region4: #{iir_conv_net_forward.1} parent=0 // loop_header_branch
    %21 = sbr.rel (%p19) target = $region8
  $region5: #{iir_conv_net_forward.1} parent=0 // loop_body
    %s23 = ssub.s32 %s18, 1
    %s24 = ssub.s32 %s18, 2
    %s25 = sadd.s32 %s18, 1
    %s26 = ssub.s32 %s18, %s25
    %p27 = scmp.eq.s32.totalorder %s26, 0
    %s29 = sadd.s32 %s28, 1
    %s30 = scalar_select %p27, %s28, %s29
    %p33 = pneg %p27
    %p34 = scmp.eq.s32.totalorder %s18, 1
    %p35 = por %p33, %p34
    %p36 = scmp.ne.s32.totalorder %s28, %s31
    %p37 = scmp.eq.s32.totalorder %s18, 0
    %p38 = por %p36, %p37
    %p39 = scmp.ne.s32.totalorder %s28, %s31
    %p40 = scmp.eq.s32.totalorder %s23, 1
    %p41 = por %p39, %p40
    %p42 = scmp.ne.s32.totalorder %s31, %s32
    %p43 = scmp.eq.s32.totalorder %s23, 0
    %p44 = por %p42, %p43
    %p45 = scmp.ne.s32.totalorder %s31, %s32
    %p46 = scmp.eq.s32.totalorder %s24, 1
    %p47 = por %p45, %p46
    %p49 = scmp.ne.s32.totalorder %s32, %s48
    %p50 = scmp.eq.s32.totalorder %s24, 0
    %p51 = por %p49, %p50
    %s53 = sadd.s32 %s52, 1
    %p56 = scmp.eq.s32.totalorder %s18, 1
    %p57 = scmp.ne.s32.totalorder %s52, %s54
    %p58 = scmp.eq.s32.totalorder %s18, 0
    %p59 = por %p57, %p58
    %p60 = scmp.ne.s32.totalorder %s52, %s54
    %p61 = scmp.eq.s32.totalorder %s23, 1
    %p62 = por %p60, %p61
    %p63 = scmp.ne.s32.totalorder %s54, %s55
    %p64 = scmp.eq.s32.totalorder %s23, 0
    %p65 = por %p63, %p64
    %p66 = scmp.ne.s32.totalorder %s54, %s55
    %p67 = scmp.eq.s32.totalorder %s24, 1
    %p68 = por %p66, %p67
    %p70 = scmp.ne.s32.totalorder %s55, %s69
    %p71 = scmp.eq.s32.totalorder %s24, 0
    %p72 = por %p70, %p71
    %s74 = sadd.s32 %s73, 1
    %p77 = scmp.eq.s32.totalorder %s18, 1
    %p78 = scmp.ne.s32.totalorder %s73, %s75
    %p79 = scmp.eq.s32.totalorder %s18, 0
    %p80 = por %p78, %p79
    %p81 = scmp.ne.s32.totalorder %s73, %s75
    %p82 = scmp.eq.s32.totalorder %s23, 1
    %p83 = por %p81, %p82
    %p84 = scmp.ne.s32.totalorder %s75, %s76
    %p85 = scmp.eq.s32.totalorder %s23, 0
    %p86 = por %p84, %p85
    %p87 = scmp.ne.s32.totalorder %s75, %s76
    %p88 = scmp.eq.s32.totalorder %s24, 1
    %p89 = por %p87, %p88
    %p91 = scmp.ne.s32.totalorder %s76, %s90
    %p92 = scmp.eq.s32.totalorder %s24, 0
    %p93 = por %p91, %p92
    %s95 = sadd.s32 %s94, 1
    %p98 = scmp.eq.s32.totalorder %s18, 1
    %p99 = scmp.ne.s32.totalorder %s94, %s96
    %p100 = scmp.eq.s32.totalorder %s18, 0
    %p101 = por %p99, %p100
    %p102 = scmp.ne.s32.totalorder %s94, %s96
    %p103 = scmp.eq.s32.totalorder %s23, 1
    %p104 = por %p102, %p103
    %p105 = scmp.ne.s32.totalorder %s96, %s97
    %p106 = scmp.eq.s32.totalorder %s23, 0
    %p107 = por %p105, %p106
    %p108 = scmp.ne.s32.totalorder %s96, %s97
    %p109 = scmp.eq.s32.totalorder %s24, 1
    %p110 = por %p108, %p109
    %p112 = scmp.ne.s32.totalorder %s97, %s111
    %p113 = scmp.eq.s32.totalorder %s24, 0
    %p114 = por %p112, %p113
    %s116 = sadd.s32 %s115, 1
    %p119 = scmp.eq.s32.totalorder %s18, 1
    %p120 = scmp.ne.s32.totalorder %s115, %s117
    %p121 = scmp.eq.s32.totalorder %s18, 0
    %p122 = por %p120, %p121
    %p123 = scmp.ne.s32.totalorder %s115, %s117
    %p124 = scmp.eq.s32.totalorder %s23, 1
    %p125 = por %p123, %p124
    %p126 = scmp.ne.s32.totalorder %s117, %s118
    %p127 = scmp.eq.s32.totalorder %s23, 0
    %p128 = por %p126, %p127
    %p129 = scmp.ne.s32.totalorder %s117, %s118
    %p130 = scmp.eq.s32.totalorder %s24, 1
    %p131 = por %p129, %p130
    %p133 = scmp.ne.s32.totalorder %s118, %s132
    %p134 = scmp.eq.s32.totalorder %s24, 0
    %p135 = por %p133, %p134
    %s137 = sadd.s32 %s136, 1
    %p140 = scmp.eq.s32.totalorder %s18, 1
    %p141 = scmp.ne.s32.totalorder %s136, %s138
    %p142 = scmp.eq.s32.totalorder %s18, 0
    %p143 = por %p141, %p142
    %p144 = scmp.ne.s32.totalorder %s136, %s138
    %p145 = scmp.eq.s32.totalorder %s23, 1
    %p146 = por %p144, %p145
    %p147 = scmp.ne.s32.totalorder %s138, %s139
    %p148 = scmp.eq.s32.totalorder %s23, 0
    %p149 = por %p147, %p148
    %p150 = scmp.ne.s32.totalorder %s138, %s139
    %p151 = scmp.eq.s32.totalorder %s24, 1
    %p152 = por %p150, %p151
    %p154 = scmp.ne.s32.totalorder %s139, %s153
    %p155 = scmp.eq.s32.totalorder %s24, 0
    %p156 = por %p154, %p155
    %s158 = sadd.s32 %s157, 1
    %p161 = scmp.eq.s32.totalorder %s18, 1
    %p162 = scmp.ne.s32.totalorder %s157, %s159
    %p163 = scmp.eq.s32.totalorder %s18, 0
    %p164 = por %p162, %p163
    %p165 = scmp.ne.s32.totalorder %s157, %s159
    %p166 = scmp.eq.s32.totalorder %s23, 1
    %p167 = por %p165, %p166
    %p168 = scmp.ne.s32.totalorder %s159, %s160
    %p169 = scmp.eq.s32.totalorder %s23, 0
    %p170 = por %p168, %p169
    %p171 = scmp.ne.s32.totalorder %s159, %s160
    %p172 = scmp.eq.s32.totalorder %s24, 1
    %p173 = por %p171, %p172
    %p175 = scmp.ne.s32.totalorder %s160, %s174
    %p176 = scmp.eq.s32.totalorder %s24, 0
    %p177 = por %p175, %p176
    %s179 = sadd.s32 %s178, 1
    %p182 = scmp.eq.s32.totalorder %s18, 1
    %p183 = scmp.ne.s32.totalorder %s178, %s180
    %p184 = scmp.eq.s32.totalorder %s18, 0
    %p185 = por %p183, %p184
    %p186 = scmp.ne.s32.totalorder %s178, %s180
    %p187 = scmp.eq.s32.totalorder %s23, 1
    %p188 = por %p186, %p187
    %p189 = scmp.ne.s32.totalorder %s180, %s181
    %p190 = scmp.eq.s32.totalorder %s23, 0
    %p191 = por %p189, %p190
    %p192 = scmp.ne.s32.totalorder %s180, %s181
    %p193 = scmp.eq.s32.totalorder %s24, 1
    %p194 = por %p192, %p193
    %p196 = scmp.ne.s32.totalorder %s181, %s195
    %p197 = scmp.eq.s32.totalorder %s24, 0
    %p198 = por %p196, %p197
    %s200 = sadd.s32 %s199, 1
    %p203 = scmp.eq.s32.totalorder %s18, 1
    %p204 = scmp.ne.s32.totalorder %s199, %s201
    %p205 = scmp.eq.s32.totalorder %s18, 0
    %p206 = por %p204, %p205
    %p207 = scmp.ne.s32.totalorder %s199, %s201
    %p208 = scmp.eq.s32.totalorder %s23, 1
    %p209 = por %p207, %p208
    %p210 = scmp.ne.s32.totalorder %s201, %s202
    %p211 = scmp.eq.s32.totalorder %s23, 0
    %p212 = por %p210, %p211
    %p213 = scmp.ne.s32.totalorder %s201, %s202
    %p214 = scmp.eq.s32.totalorder %s24, 1
    %p215 = por %p213, %p214
    %p217 = scmp.ne.s32.totalorder %s202, %s216
    %p218 = scmp.eq.s32.totalorder %s24, 0
    %p219 = por %p217, %p218
    %s221 = sadd.s32 %s220, 1
    %p224 = scmp.eq.s32.totalorder %s18, 1
    %p225 = scmp.ne.s32.totalorder %s220, %s222
    %p226 = scmp.eq.s32.totalorder %s18, 0
    %p227 = por %p225, %p226
    %p228 = scmp.ne.s32.totalorder %s220, %s222
    %p229 = scmp.eq.s32.totalorder %s23, 1
    %p230 = por %p228, %p229
    %p231 = scmp.ne.s32.totalorder %s222, %s223
    %p232 = scmp.eq.s32.totalorder %s23, 0
    %p233 = por %p231, %p232
    %p234 = scmp.ne.s32.totalorder %s222, %s223
    %p235 = scmp.eq.s32.totalorder %s24, 1
    %p236 = por %p234, %p235
    %p238 = scmp.ne.s32.totalorder %s223, %s237
    %p239 = scmp.eq.s32.totalorder %s24, 0
    %p240 = por %p238, %p239
    %s242 = sadd.s32 %s241, 1
    %p245 = scmp.eq.s32.totalorder %s18, 1
    %p246 = scmp.ne.s32.totalorder %s241, %s243
    %p247 = scmp.eq.s32.totalorder %s18, 0
    %p248 = por %p246, %p247
    %p249 = scmp.ne.s32.totalorder %s241, %s243
    %p250 = scmp.eq.s32.totalorder %s23, 1
    %p251 = por %p249, %p250
    %p252 = scmp.ne.s32.totalorder %s243, %s244
    %p253 = scmp.eq.s32.totalorder %s23, 0
    %p254 = por %p252, %p253
    %p255 = scmp.ne.s32.totalorder %s243, %s244
    %p256 = scmp.eq.s32.totalorder %s24, 1
    %p257 = por %p255, %p256
    %p259 = scmp.ne.s32.totalorder %s244, %s258
    %p260 = scmp.eq.s32.totalorder %s24, 0
    %p261 = por %p259, %p260
    %s263 = sadd.s32 %s262, 1
    %p266 = scmp.eq.s32.totalorder %s18, 1
    %p267 = scmp.ne.s32.totalorder %s262, %s264
    %p268 = scmp.eq.s32.totalorder %s18, 0
    %p269 = por %p267, %p268
    %p270 = scmp.ne.s32.totalorder %s262, %s264
    %p271 = scmp.eq.s32.totalorder %s23, 1
    %p272 = por %p270, %p271
    %p273 = scmp.ne.s32.totalorder %s264, %s265
    %p274 = scmp.eq.s32.totalorder %s23, 0
    %p275 = por %p273, %p274
    %p276 = scmp.ne.s32.totalorder %s264, %s265
    %p277 = scmp.eq.s32.totalorder %s24, 1
    %p278 = por %p276, %p277
    %p280 = scmp.ne.s32.totalorder %s265, %s279
    %p281 = scmp.eq.s32.totalorder %s24, 0
    %p282 = por %p280, %p281
    %s283 = ssub.s32 %s18, %s25
    %p284 = scmp.eq.s32.totalorder %s283, 0
    %s286 = sadd.s32 %s285, 1
    %s287 = scalar_select %p284, %s285, %s286
    %p290 = pneg %p284
    %p291 = scmp.eq.s32.totalorder %s18, 1
    %p292 = por %p290, %p291
    %p293 = scmp.ne.s32.totalorder %s285, %s288
    %p294 = scmp.eq.s32.totalorder %s18, 0
    %p295 = por %p293, %p294
    %p296 = scmp.ne.s32.totalorder %s285, %s288
    %p297 = scmp.eq.s32.totalorder %s23, 1
    %p298 = por %p296, %p297
    %p299 = scmp.ne.s32.totalorder %s288, %s289
    %p300 = scmp.eq.s32.totalorder %s23, 0
    %p301 = por %p299, %p300
    %p302 = scmp.ne.s32.totalorder %s288, %s289
    %p303 = scmp.eq.s32.totalorder %s24, 1
    %p304 = por %p302, %p303
    %p306 = scmp.ne.s32.totalorder %s289, %s305
    %p307 = scmp.eq.s32.totalorder %s24, 0
    %p308 = por %p306, %p307
    %p309 = scmp.le.s32.totalorder 1, %s18
    %p310 = scmp.lt.s32.totalorder %s18, 3
    %p311 = pnand %p309, %p310
    %p312 = pneg %p311
    // Predicated region
    $region9: #{iir_conv_net_forward.1} parent=5 // pred_check
      _
    $region10: #{iir_conv_net_forward.1} parent=5 // pred_check_branch
      %314 = sbr.rel (%p311) target = $region12
    $region11: #{iir_conv_net_forward.1} parent=5 // pred_region
      %s315 = ssub.s32 %s18, 1
      // Predicated region
      $region13: #{iir_conv_net_forward.1} parent=11 // pred_check
        %p316 = pneg %p65
      $region14: #{iir_conv_net_forward.1} parent=11 // pred_check_branch
        %318 = sbr.rel (%p316) target = $region16
      $region15: #{iir_conv_net_forward.1} parent=11 // pred_region
        _
      $region16: #{iir_conv_net_forward.1} parent=11 // pred_fallthru
        _
      // Predicated region
      $region17: #{iir_conv_net_forward.1} parent=11 // pred_check
        %p319 = pneg %p86
      $region18: #{iir_conv_net_forward.1} parent=11 // pred_check_branch
        %321 = sbr.rel (%p319) target = $region20
      $region19: #{iir_conv_net_forward.1} parent=11 // pred_region
        _
      $region20: #{iir_conv_net_forward.1} parent=11 // pred_fallthru
        _
      // Predicated region
      $region21: #{iir_conv_net_forward.1} parent=11 // pred_check
        %p322 = pneg %p107
      $region22: #{iir_conv_net_forward.1} parent=11 // pred_check_branch
        %324 = sbr.rel (%p322) target = $region24
      $region23: #{iir_conv_net_forward.1} parent=11 // pred_region
        _
      $region24: #{iir_conv_net_forward.1} parent=11 // pred_fallthru
        _
      // Predicated region
      $region25: #{iir_conv_net_forward.1} parent=11 // pred_check
        %p325 = pneg %p128
      $region26: #{iir_conv_net_forward.1} parent=11 // pred_check_branch
        %327 = sbr.rel (%p325) target = $region28
      $region27: #{iir_conv_net_forward.1} parent=11 // pred_region
        _
      $region28: #{iir_conv_net_forward.1} parent=11 // pred_fallthru
        _
      // Predicated region
      $region29: #{iir_conv_net_forward.1} parent=11 // pred_check
        %p328 = pneg %p149
      $region30: #{iir_conv_net_forward.1} parent=11 // pred_check_branch
        %330 = sbr.rel (%p328) target = $region32
      $region31: #{iir_conv_net_forward.1} parent=11 // pred_region
        _
      $region32: #{iir_conv_net_forward.1} parent=11 // pred_fallthru
        _
      // Predicated region
      $region33: #{iir_conv_net_forward.1} parent=11 // pred_check
        %p331 = pneg %p170
      $region34: #{iir_conv_net_forward.1} parent=11 // pred_check_branch
        %333 = sbr.rel (%p331) target = $region36
      $region35: #{iir_conv_net_forward.1} parent=11 // pred_region
        _
      $region36: #{iir_conv_net_forward.1} parent=11 // pred_fallthru
        _
      // Predicated region
      $region37: #{iir_conv_net_forward.1} parent=11 // pred_check
        %p334 = pneg %p191
      $region38: #{iir_conv_net_forward.1} parent=11 // pred_check_branch
        %336 = sbr.rel (%p334) target = $region40
      $region39: #{iir_conv_net_forward.1} parent=11 // pred_region
        _
      $region40: #{iir_conv_net_forward.1} parent=11 // pred_fallthru
        _
      // Predicated region
      $region41: #{iir_conv_net_forward.1} parent=11 // pred_check
        %p337 = pneg %p212
      $region42: #{iir_conv_net_forward.1} parent=11 // pred_check_branch
        %339 = sbr.rel (%p337) target = $region44
      $region43: #{iir_conv_net_forward.1} parent=11 // pred_region
        _
      $region44: #{iir_conv_net_forward.1} parent=11 // pred_fallthru
        _
      // Predicated region
      $region45: #{iir_conv_net_forward.1} parent=11 // pred_check
        %p340 = pneg %p233
      $region46: #{iir_conv_net_forward.1} parent=11 // pred_check_branch
        %342 = sbr.rel (%p340) target = $region48
      $region47: #{iir_conv_net_forward.1} parent=11 // pred_region
        _
      $region48: #{iir_conv_net_forward.1} parent=11 // pred_fallthru
        _
      // Predicated region
      $region49: #{iir_conv_net_forward.1} parent=11 // pred_check
        %p343 = pneg %p254
      $region50: #{iir_conv_net_forward.1} parent=11 // pred_check_branch
        %345 = sbr.rel (%p343) target = $region52
      $region51: #{iir_conv_net_forward.1} parent=11 // pred_region
        _
      $region52: #{iir_conv_net_forward.1} parent=11 // pred_fallthru
        _
      // Predicated region
      $region53: #{iir_conv_net_forward.1} parent=11 // pred_check
        %p346 = pneg %p275
      $region54: #{iir_conv_net_forward.1} parent=11 // pred_check_branch
        %348 = sbr.rel (%p346) target = $region56
      $region55: #{iir_conv_net_forward.1} parent=11 // pred_region
        _
      $region56: #{iir_conv_net_forward.1} parent=11 // pred_fallthru
        _
    $region12: #{iir_conv_net_forward.1} parent=5 // pred_fallthru
      _
    %p349 = scmp.lt.s32.totalorder %s18, 2
    // Predicated region
    $region57: #{iir_conv_net_forward.1} parent=5 // pred_check
      %p350 = pneg %p349
    $region58: #{iir_conv_net_forward.1} parent=5 // pred_check_branch
      %352 = sbr.rel (%p350) target = $region60
    $region59: #{iir_conv_net_forward.1} parent=5 // pred_region
      // Predicated region
      $region61: #{iir_conv_net_forward.1} parent=59 // pred_check
        %p353 = pneg %p38
      $region62: #{iir_conv_net_forward.1} parent=59 // pred_check_branch
        %355 = sbr.rel (%p353) target = $region64
      $region63: #{iir_conv_net_forward.1} parent=59 // pred_region
        %p356 = scmp.lt.s32.totalorder %s18, 1
        %s357 = scalar_select %p356, %s18, 1
        %s358 = smul.addr %s357, 2
        %s359 = smul.addr %s358, 8
        %s360 = scalar_lea.vmem %s0, %s359
      $region64: #{iir_conv_net_forward.1} parent=59 // pred_fallthru
        _
    $region60: #{iir_conv_net_forward.1} parent=5 // pred_fallthru
      _
    %p361 = scmp.le.s32.totalorder 1, %s18
    %p362 = scmp.lt.s32.totalorder %s18, 3
    %p363 = pnand %p361, %p362
    %p364 = pneg %p363
    // Predicated region
    $region65: #{iir_conv_net_forward.1} parent=5 // pred_check
      _
    $region66: #{iir_conv_net_forward.1} parent=5 // pred_check_branch
      %366 = sbr.rel (%p363) target = $region68
    $region67: #{iir_conv_net_forward.1} parent=5 // pred_region
      %s367 = ssub.s32 %s18, 1
      %p368 = scmp.lt.s32.totalorder %s23, 1
      %s369 = scalar_select %p368, %s23, 1
      %s370 = smul.addr %s369, 2
      %s371 = smul.addr %s370, 8
      %s372 = scalar_lea.vmem %s0, %s371
      %p373 = pneg %p44
      %p374 = pneg %p41
      %p375 = pneg %p65
      %p376 = pneg %p62
      %p377 = pneg %p86
      %p378 = pneg %p83
      %p379 = pneg %p107
      %p380 = pneg %p104
      %p381 = pneg %p128
      %p382 = pneg %p125
      %p383 = pneg %p149
      %p384 = pneg %p146
      %p385 = pneg %p170
      %p386 = pneg %p167
      %p387 = pneg %p191
      %p388 = pneg %p188
      %p389 = pneg %p212
      %p390 = pneg %p209
      %p391 = pneg %p233
      %p392 = pneg %p230
      %p393 = pneg %p254
      %p394 = pneg %p251
      %p395 = pneg %p275
      %p396 = pneg %p272
      %p397 = pneg %p301
      %p398 = pneg %p298
      %p399 = scmp.lt.s32.totalorder %s23, 1
      %s400 = scalar_select %p399, %s23, 1
      %s401 = smul.addr %s400, 2
      %s402 = smul.addr %s401, 4
      %s403 = scalar_lea.vmem %s12, %s402
      %p404 = scmp.lt.s32.totalorder %s23, 1
      %s405 = scalar_select %p404, %s23, 1
      %s406 = smul.addr %s405, 2
      %s407 = smul.addr %s406, 8
      %s408 = scalar_lea.vmem %s0, %s407
      %p409 = scmp.lt.s32.totalorder %s23, 1
      %s410 = scalar_select %p409, %s23, 1
      %s411 = smul.addr %s410, 2
      %s412 = smul.addr %s411, 4
      %s413 = scalar_lea.vmem %s12, %s412
      %v414 = vld [vmem:[%s1] sm:$0xff]
      %v415 = vld [vmem:[%s1 + $0x8] sm:$0xff]
      %v416 = vld [vmem:[%s1 + $0x10] sm:$0x1]
      %v417 = vld [vmem:[%s1 + $0x18] sm:$0x1]
      %v418 = vld [vmem:[%s408] sm:$0xff]
      %v419 = vld [vmem:[%s408 + $0x8] sm:$0xff]
      %421 = vrot.lane.b32.xlu0 %v419, 17
      %v422 = vpop.permute.xlu0 %421
      %425 = vrot.lane.b32.xlu0 %v418, 17
      %v426 = vpop.permute.xlu0 %425
      %vm427 = vcmask 138240
      %v428 = vsel %vm427, %v426, %v422
      %v431 = vsel %vm427, %v422, %v426
      %v432 = vlaneseq
      %v433 = vshrl.u32 %v432, 7
      %v434 = vsub.s32 0, %v433
      %v435 = vrot.slane %v414, %v434
      %v436 = vlaneseq
      %v437 = vshrl.u32 %v436, 7
      %v438 = vsub.s32 0, %v437
      %v439 = vrot.slane %v415, %v438
      %v440 = vmul.f32 %v431, %v435
      %v441 = vmul.f32 %v428, %v439
      %442 = vrot.lane.b32.xlu0 %v419, 16
      %v443 = vpop.permute.xlu0 %442
      %445 = vrot.lane.b32.xlu0 %v418, 16
      %v446 = vpop.permute.xlu0 %445
      %vm447 = vcmask 130048
      %v448 = vsel %vm447, %v446, %v443
      %v451 = vsel %vm447, %v443, %v446
      %v452 = vlaneseq
      %v453 = vshrl.u32 %v452, 7
      %v454 = vsub.s32 1, %v453
      %v455 = vrot.slane %v414, %v454
      %v456 = vlaneseq
      %v457 = vshrl.u32 %v456, 7
      %v458 = vsub.s32 1, %v457
      %v459 = vrot.slane %v415, %v458
      %v460 = vmul.f32 %v451, %v455
      %v461 = vmul.f32 %v448, %v459
      %462 = vrot.lane.b32.xlu0 %v419, 15
      %v463 = vpop.permute.xlu0 %462
      %465 = vrot.lane.b32.xlu0 %v418, 15
      %v466 = vpop.permute.xlu0 %465
      %vm467 = vcmask 121856
      %v468 = vsel %vm467, %v466, %v463
      %v471 = vsel %vm467, %v463, %v466
      %v472 = vlaneseq
      %v473 = vshrl.u32 %v472, 7
      %v474 = vsub.s32 2, %v473
      %v475 = vrot.slane %v414, %v474
      %v476 = vlaneseq
      %v477 = vshrl.u32 %v476, 7
      %v478 = vsub.s32 2, %v477
      %v479 = vrot.slane %v415, %v478
      %v480 = vmul.f32 %v471, %v475
      %v481 = vmul.f32 %v468, %v479
      %482 = vrot.lane.b32.xlu0 %v419, 1
      %v483 = vpop.permute.xlu0 %482
      %485 = vrot.lane.b32.xlu0 %v418, 1
      %v486 = vpop.permute.xlu0 %485
      %vm487 = vcmask 7168
      %v488 = vsel %vm487, %v486, %v483
      %v491 = vsel %vm487, %v483, %v486
      %v492 = vlaneseq
      %v493 = vshrl.u32 %v492, 7
      %v494 = vsub.s32 3, %v493
      %v495 = vrot.slane %v414, %v494
      %v496 = vlaneseq
      %v497 = vshrl.u32 %v496, 7
      %v498 = vsub.s32 3, %v497
      %v499 = vrot.slane %v415, %v498
      %v500 = vmul.f32 %v491, %v495
      %v501 = vmul.f32 %v488, %v499
      %502 = vrot.lane.b32.xlu0 %v418, 127
      %v503 = vpop.permute.xlu0 %502
      %504 = vrot.lane.b32.xlu0 %v419, 127
      %v505 = vpop.permute.xlu0 %504
      %vm506 = vcmask 1039360
      %v507 = vsel %vm506, %v503, %v505
      %v511 = vsel %vm506, %v505, %v503
      %v512 = vlaneseq
      %v513 = vshrl.u32 %v512, 7
      %v514 = vsub.s32 5, %v513
      %v515 = vrot.slane %v414, %v514
      %v516 = vlaneseq
      %v517 = vshrl.u32 %v516, 7
      %v518 = vsub.s32 5, %v517
      %v519 = vrot.slane %v415, %v518
      %v520 = vmul.f32 %v507, %v515
      %v521 = vmul.f32 %v511, %v519
      %522 = vrot.lane.b32.xlu0 %v418, 113
      %v523 = vpop.permute.xlu0 %522
      %524 = vrot.lane.b32.xlu0 %v419, 113
      %v525 = vpop.permute.xlu0 %524
      %vm526 = vcmask 924672
      %v527 = vsel %vm526, %v523, %v525
      %v531 = vsel %vm526, %v525, %v523
      %v532 = vlaneseq
      %v533 = vshrl.u32 %v532, 7
      %v534 = vsub.s32 6, %v533
      %v535 = vrot.slane %v414, %v534
      %v536 = vlaneseq
      %v537 = vshrl.u32 %v536, 7
      %v538 = vsub.s32 6, %v537
      %v539 = vrot.slane %v415, %v538
      %v540 = vmul.f32 %v527, %v535
      %v541 = vmul.f32 %v531, %v539
      %542 = vrot.lane.b32.xlu0 %v418, 112
      %v543 = vpop.permute.xlu0 %542
      %544 = vrot.lane.b32.xlu0 %v419, 112
      %v545 = vpop.permute.xlu0 %544
      %vm546 = vcmask 916480
      %v547 = vsel %vm546, %v543, %v545
      %v551 = vsel %vm546, %v545, %v543
      %v552 = vlaneseq
      %v553 = vshrl.u32 %v552, 7
      %v554 = vsub.s32 7, %v553
      %v555 = vrot.slane %v414, %v554
      %v556 = vlaneseq
      %v557 = vshrl.u32 %v556, 7
      %v558 = vsub.s32 7, %v557
      %v559 = vrot.slane %v415, %v558
      %v560 = vmul.f32 %v547, %v555
      %v561 = vmul.f32 %v551, %v559
      %562 = vrot.lane.b32.xlu0 %v418, 111
      %v563 = vpop.permute.xlu0 %562
      %564 = vrot.lane.b32.xlu0 %v419, 111
      %v565 = vpop.permute.xlu0 %564
      %vm566 = vcmask 908288
      %v567 = vsel %vm566, %v563, %v565
      %v571 = vsel %vm566, %v565, %v563
      %v572 = vlaneseq
      %v573 = vshrl.u32 %v572, 7
      %v574 = vsub.s32 0, %v573
      %v575 = vrot.slane %v416, %v574
      %v576 = vlaneseq
      %v577 = vshrl.u32 %v576, 7
      %v578 = vsub.s32 0, %v577
      %v579 = vrot.slane %v417, %v578
      %v580 = vmul.f32 %v567, %v575
      %v581 = vmul.f32 %v571, %v579
      %v582 = vld [vmem:[%s2] sm:$0xff]
      %v583 = vld [vmem:[%s3] sm:$0xff]
      %585 = vset.pattern.permute.xlu0 0
      %586 = vperm.xlu0 %585, %v583
      %v587 = vpop.permute.xlu0 %586
      %vm589 = vcmask 588800
      %v591 = vsel %vm589, %v582, 0
      %593 = vmatprep.subr.mxu0 %v441
      %594 = vmatpush1.msra.mxu0 %v440
      %595 = vmatprep.subr.mxu0 %v461
      %596 = vmatpush1.msra.mxu0 %v460
      %597 = vmatprep.subr.mxu0 %v481
      %598 = vmatpush1.msra.mxu0 %v480
      %599 = vmatprep.subr.mxu0 %v501
      %600 = vmatpush1.msra.mxu0 %v500
      %601 = vmatprep.subr.mxu0 %v419
      %602 = vmatpush1.msra.mxu0 %v418
      %603 = vmatprep.subr.mxu0 %v521
      %604 = vmatpush1.msra.mxu0 %v520
      %605 = vmatprep.subr.mxu0 %v541
      %606 = vmatpush1.msra.mxu0 %v540
      %607 = vmatprep.subr.mxu0 %v561
      %608 = vmatpush1.msra.mxu0 %v560
      %609 = vmatprep.subr.mxu0 %v581
      %610 = vmatpush1.msra.mxu0 %v580
      %611 = vmatprep.subr.mxu0 0.0
      %612 = vmatpush1.msra.mxu0 0.0
      %613 = vmatprep.subr.mxu0 0.0
      %614 = vmatpush1.msra.mxu0 0.0
      %615 = vmatprep.subr.mxu0 0.0
      %616 = vmatpush1.msra.mxu0 0.0
      %617 = vmatprep.subr.mxu0 0.0
      %618 = vmatpush1.msra.mxu0 0.0
      %619 = vmatprep.subr.mxu0 0.0
      %620 = vmatpush1.msra.mxu0 0.0
      %621 = vmatprep.subr.mxu0 0.0
      %622 = vmatpush1.msra.mxu0 0.0
      %623 = vmatprep.subr.mxu0 0.0
      %624 = vmatpush1.msra.mxu0 0.0
      %625 = vmatprep.subr.mxu0 0.0
      %626 = vmatpush1.msra.mxu0 0.0
      %627 = vmatprep.subr.mxu0 0.0
      %628 = vmatpush1.msra.mxu0 0.0
      %629 = vmatprep.subr.mxu0 0.0
      %630 = vmatpush1.msra.mxu0 0.0
      %631 = vmatprep.subr.mxu0 0.0
      %632 = vmatpush1.msra.mxu0 0.0
      %633 = vmatprep.subr.mxu0 0.0
      %634 = vmatpush1.msra.mxu0 0.0
      %635 = vmatprep.subr.mxu0 0.0
      %636 = vmatpush1.msra.mxu0 0.0
      %637 = vmatprep.subr.mxu0 0.0
      %638 = vmatpush1.msra.mxu0 0.0
      %639 = vmatprep.subr.mxu0 0.0
      %640 = vmatpush1.msra.mxu0 0.0
      %641 = vmatprep.subr.mxu0 0.0
      %642 = vmatpush1.msra.mxu0 0.0
      %643 = vmatprep.subr.mxu0 0.0
      %644 = vmatpush1.msra.mxu0 0.0
      %645 = vmatprep.subr.mxu0 0.0
      %646 = vmatpush1.msra.mxu0 0.0
      %647 = vmatprep.subr.mxu0 0.0
      %648 = vmatpush1.msra.mxu0 0.0
      %649 = vmatprep.subr.mxu0 0.0
      %650 = vmatpush1.msra.mxu0 0.0
      %651 = vmatprep.subr.mxu0 0.0
      %652 = vmatpush1.msra.mxu0 0.0
      %653 = vmatprep.subr.mxu0 0.0
      %654 = vmatpush1.msra.mxu0 0.0
      %655 = vmatprep.subr.mxu0 0.0
      %656 = vmatpush1.msra.mxu0 0.0
      %657 = vmatprep.mubr.f32.mxu0 0.0
      %658 = vmatmul.mubr.f32.gmra.mrb[0].mxu0 %v591
      %v659 = vpop.f32.mrb[0].mxu0
      %v660 = vadd.f32 %v587, %v659
      %v661 = vpop.f32.mrb[0].mxu0
      %v662 = vadd.f32 %v587, %v661
      %663 = vdwg.mxu0
      %665 = vrot.lane.b32.xlu0 %v662, 17
      %v666 = vpop.permute.xlu0 %665
      %669 = vrot.lane.b32.xlu0 %v660, 17
      %v670 = vpop.permute.xlu0 %669
      %v671 = vsel %vm427, %v670, %v666
      %v674 = vsel %vm427, %v666, %v670
      %v675 = vmul.f32 %v674, %v435
      %v676 = vmul.f32 %v671, %v439
      %677 = vrot.lane.b32.xlu0 %v662, 16
      %v678 = vpop.permute.xlu0 %677
      %680 = vrot.lane.b32.xlu0 %v660, 16
      %v681 = vpop.permute.xlu0 %680
      %v682 = vsel %vm447, %v681, %v678
      %v685 = vsel %vm447, %v678, %v681
      %v686 = vmul.f32 %v685, %v455
      %v687 = vmul.f32 %v682, %v459
      %688 = vrot.lane.b32.xlu0 %v662, 15
      %v689 = vpop.permute.xlu0 %688
      %691 = vrot.lane.b32.xlu0 %v660, 15
      %v692 = vpop.permute.xlu0 %691
      %v693 = vsel %vm467, %v692, %v689
      %v696 = vsel %vm467, %v689, %v692
      %v697 = vmul.f32 %v696, %v475
      %v698 = vmul.f32 %v693, %v479
      %699 = vrot.lane.b32.xlu0 %v662, 1
      %v700 = vpop.permute.xlu0 %699
      %702 = vrot.lane.b32.xlu0 %v660, 1
      %v703 = vpop.permute.xlu0 %702
      %v704 = vsel %vm487, %v703, %v700
      %v707 = vsel %vm487, %v700, %v703
      %v708 = vmul.f32 %v707, %v495
      %v709 = vmul.f32 %v704, %v499
      %710 = vrot.lane.b32.xlu0 %v660, 127
      %v711 = vpop.permute.xlu0 %710
      %712 = vrot.lane.b32.xlu0 %v662, 127
      %v713 = vpop.permute.xlu0 %712
      %v714 = vsel %vm506, %v711, %v713
      %v718 = vsel %vm506, %v713, %v711
      %v719 = vmul.f32 %v714, %v515
      %v720 = vmul.f32 %v718, %v519
      %721 = vrot.lane.b32.xlu0 %v660, 113
      %v722 = vpop.permute.xlu0 %721
      %723 = vrot.lane.b32.xlu0 %v662, 113
      %v724 = vpop.permute.xlu0 %723
      %v725 = vsel %vm526, %v722, %v724
      %v729 = vsel %vm526, %v724, %v722
      %v730 = vmul.f32 %v725, %v535
      %v731 = vmul.f32 %v729, %v539
      %732 = vrot.lane.b32.xlu0 %v660, 112
      %v733 = vpop.permute.xlu0 %732
      %734 = vrot.lane.b32.xlu0 %v662, 112
      %v735 = vpop.permute.xlu0 %734
      %v736 = vsel %vm546, %v733, %v735
      %v740 = vsel %vm546, %v735, %v733
      %v741 = vmul.f32 %v736, %v555
      %v742 = vmul.f32 %v740, %v559
      %743 = vrot.lane.b32.xlu0 %v660, 111
      %v744 = vpop.permute.xlu0 %743
      %745 = vrot.lane.b32.xlu0 %v662, 111
      %v746 = vpop.permute.xlu0 %745
      %v747 = vsel %vm566, %v744, %v746
      %v751 = vsel %vm566, %v746, %v744
      %v752 = vmul.f32 %v747, %v575
      %v753 = vmul.f32 %v751, %v579
      %v754 = vld [vmem:[%s4] sm:$0xff]
      %v755 = vld [vmem:[%s5] sm:$0xff]
      %757 = vset.pattern.permute.xlu0 0
      %758 = vperm.xlu0 %757, %v755
      %v759 = vpop.permute.xlu0 %758
      %v762 = vsel %vm589, %v754, 0
      %764 = vmatprep.subr.mxu0 %v676
      %765 = vmatpush1.msra.mxu0 %v675
      %766 = vmatprep.subr.mxu0 %v687
      %767 = vmatpush1.msra.mxu0 %v686
      %768 = vmatprep.subr.mxu0 %v698
      %769 = vmatpush1.msra.mxu0 %v697
      %770 = vmatprep.subr.mxu0 %v709
      %771 = vmatpush1.msra.mxu0 %v708
      %772 = vmatprep.subr.mxu0 %v662
      %773 = vmatpush1.msra.mxu0 %v660
      %774 = vmatprep.subr.mxu0 %v720
      %775 = vmatpush1.msra.mxu0 %v719
      %776 = vmatprep.subr.mxu0 %v731
      %777 = vmatpush1.msra.mxu0 %v730
      %778 = vmatprep.subr.mxu0 %v742
      %779 = vmatpush1.msra.mxu0 %v741
      %780 = vmatprep.subr.mxu0 %v753
      %781 = vmatpush1.msra.mxu0 %v752
      %782 = vmatprep.subr.mxu0 0.0
      %783 = vmatpush1.msra.mxu0 0.0
      %784 = vmatprep.subr.mxu0 0.0
      %785 = vmatpush1.msra.mxu0 0.0
      %786 = vmatprep.subr.mxu0 0.0
      %787 = vmatpush1.msra.mxu0 0.0
      %788 = vmatprep.subr.mxu0 0.0
      %789 = vmatpush1.msra.mxu0 0.0
      %790 = vmatprep.subr.mxu0 0.0
      %791 = vmatpush1.msra.mxu0 0.0
      %792 = vmatprep.subr.mxu0 0.0
      %793 = vmatpush1.msra.mxu0 0.0
      %794 = vmatprep.subr.mxu0 0.0
      %795 = vmatpush1.msra.mxu0 0.0
      %796 = vmatprep.subr.mxu0 0.0
      %797 = vmatpush1.msra.mxu0 0.0
      %798 = vmatprep.subr.mxu0 0.0
      %799 = vmatpush1.msra.mxu0 0.0
      %800 = vmatprep.subr.mxu0 0.0
      %801 = vmatpush1.msra.mxu0 0.0
      %802 = vmatprep.subr.mxu0 0.0
      %803 = vmatpush1.msra.mxu0 0.0
      %804 = vmatprep.subr.mxu0 0.0
      %805 = vmatpush1.msra.mxu0 0.0
      %806 = vmatprep.subr.mxu0 0.0
      %807 = vmatpush1.msra.mxu0 0.0
      %808 = vmatprep.subr.mxu0 0.0
      %809 = vmatpush1.msra.mxu0 0.0
      %810 = vmatprep.subr.mxu0 0.0
      %811 = vmatpush1.msra.mxu0 0.0
      %812 = vmatprep.subr.mxu0 0.0
      %813 = vmatpush1.msra.mxu0 0.0
      %814 = vmatprep.subr.mxu0 0.0
      %815 = vmatpush1.msra.mxu0 0.0
      %816 = vmatprep.subr.mxu0 0.0
      %817 = vmatpush1.msra.mxu0 0.0
      %818 = vmatprep.subr.mxu0 0.0
      %819 = vmatpush1.msra.mxu0 0.0
      %820 = vmatprep.subr.mxu0 0.0
      %821 = vmatpush1.msra.mxu0 0.0
      %822 = vmatprep.subr.mxu0 0.0
      %823 = vmatpush1.msra.mxu0 0.0
      %824 = vmatprep.subr.mxu0 0.0
      %825 = vmatpush1.msra.mxu0 0.0
      %826 = vmatprep.subr.mxu0 0.0
      %827 = vmatpush1.msra.mxu0 0.0
      %828 = vmatprep.mubr.f32.mxu0 0.0
      %829 = vmatmul.mubr.f32.gmra.mrb[0].mxu0 %v762
      %v830 = vpop.f32.mrb[0].mxu0
      %v831 = vadd.f32 %v759, %v830
      %v832 = vpop.f32.mrb[0].mxu0
      %v833 = vadd.f32 %v759, %v832
      %834 = vdwg.mxu0
      %836 = vrot.lane.b32.xlu0 %v833, 17
      %v837 = vpop.permute.xlu0 %836
      %840 = vrot.lane.b32.xlu0 %v831, 17
      %v841 = vpop.permute.xlu0 %840
      %v842 = vsel %vm427, %v841, %v837
      %v845 = vsel %vm427, %v837, %v841
      %v846 = vmul.f32 %v845, %v435
      %v847 = vmul.f32 %v842, %v439
      %848 = vrot.lane.b32.xlu0 %v833, 16
      %v849 = vpop.permute.xlu0 %848
      %851 = vrot.lane.b32.xlu0 %v831, 16
      %v852 = vpop.permute.xlu0 %851
      %v853 = vsel %vm447, %v852, %v849
      %v856 = vsel %vm447, %v849, %v852
      %v857 = vmul.f32 %v856, %v455
      %v858 = vmul.f32 %v853, %v459
      %859 = vrot.lane.b32.xlu0 %v833, 15
      %v860 = vpop.permute.xlu0 %859
      %862 = vrot.lane.b32.xlu0 %v831, 15
      %v863 = vpop.permute.xlu0 %862
      %v864 = vsel %vm467, %v863, %v860
      %v867 = vsel %vm467, %v860, %v863
      %v868 = vmul.f32 %v867, %v475
      %v869 = vmul.f32 %v864, %v479
      %870 = vrot.lane.b32.xlu0 %v833, 1
      %v871 = vpop.permute.xlu0 %870
      %873 = vrot.lane.b32.xlu0 %v831, 1
      %v874 = vpop.permute.xlu0 %873
      %v875 = vsel %vm487, %v874, %v871
      %v878 = vsel %vm487, %v871, %v874
      %v879 = vmul.f32 %v878, %v495
      %v880 = vmul.f32 %v875, %v499
      %881 = vrot.lane.b32.xlu0 %v831, 127
      %v882 = vpop.permute.xlu0 %881
      %883 = vrot.lane.b32.xlu0 %v833, 127
      %v884 = vpop.permute.xlu0 %883
      %v885 = vsel %vm506, %v882, %v884
      %v889 = vsel %vm506, %v884, %v882
      %v890 = vmul.f32 %v885, %v515
      %v891 = vmul.f32 %v889, %v519
      %892 = vrot.lane.b32.xlu0 %v831, 113
      %v893 = vpop.permute.xlu0 %892
      %894 = vrot.lane.b32.xlu0 %v833, 113
      %v895 = vpop.permute.xlu0 %894
      %v896 = vsel %vm526, %v893, %v895
      %v900 = vsel %vm526, %v895, %v893
      %v901 = vmul.f32 %v896, %v535
      %v902 = vmul.f32 %v900, %v539
      %903 = vrot.lane.b32.xlu0 %v831, 112
      %v904 = vpop.permute.xlu0 %903
      %905 = vrot.lane.b32.xlu0 %v833, 112
      %v906 = vpop.permute.xlu0 %905
      %v907 = vsel %vm546, %v904, %v906
      %v911 = vsel %vm546, %v906, %v904
      %v912 = vmul.f32 %v907, %v555
      %v913 = vmul.f32 %v911, %v559
      %914 = vrot.lane.b32.xlu0 %v831, 111
      %v915 = vpop.permute.xlu0 %914
      %916 = vrot.lane.b32.xlu0 %v833, 111
      %v917 = vpop.permute.xlu0 %916
      %v918 = vsel %vm566, %v915, %v917
      %v922 = vsel %vm566, %v917, %v915
      %v923 = vmul.f32 %v918, %v575
      %v924 = vmul.f32 %v922, %v579
      %v925 = vld [vmem:[%s6] sm:$0xff]
      %v926 = vld [vmem:[%s7] sm:$0xff]
      %928 = vset.pattern.permute.xlu0 0
      %929 = vperm.xlu0 %928, %v926
      %v930 = vpop.permute.xlu0 %929
      %v933 = vsel %vm589, %v925, 0
      %935 = vmatprep.subr.mxu0 %v847
      %936 = vmatpush1.msra.mxu0 %v846
      %937 = vmatprep.subr.mxu0 %v858
      %938 = vmatpush1.msra.mxu0 %v857
      %939 = vmatprep.subr.mxu0 %v869
      %940 = vmatpush1.msra.mxu0 %v868
      %941 = vmatprep.subr.mxu0 %v880
      %942 = vmatpush1.msra.mxu0 %v879
      %943 = vmatprep.subr.mxu0 %v833
      %944 = vmatpush1.msra.mxu0 %v831
      %945 = vmatprep.subr.mxu0 %v891
      %946 = vmatpush1.msra.mxu0 %v890
      %947 = vmatprep.subr.mxu0 %v902
      %948 = vmatpush1.msra.mxu0 %v901
      %949 = vmatprep.subr.mxu0 %v913
      %950 = vmatpush1.msra.mxu0 %v912
      %951 = vmatprep.subr.mxu0 %v924
      %952 = vmatpush1.msra.mxu0 %v923
      %953 = vmatprep.subr.mxu0 0.0
      %954 = vmatpush1.msra.mxu0 0.0
      %955 = vmatprep.subr.mxu0 0.0
      %956 = vmatpush1.msra.mxu0 0.0
      %957 = vmatprep.subr.mxu0 0.0
      %958 = vmatpush1.msra.mxu0 0.0
      %959 = vmatprep.subr.mxu0 0.0
      %960 = vmatpush1.msra.mxu0 0.0
      %961 = vmatprep.subr.mxu0 0.0
      %962 = vmatpush1.msra.mxu0 0.0
      %963 = vmatprep.subr.mxu0 0.0
      %964 = vmatpush1.msra.mxu0 0.0
      %965 = vmatprep.subr.mxu0 0.0
      %966 = vmatpush1.msra.mxu0 0.0
      %967 = vmatprep.subr.mxu0 0.0
      %968 = vmatpush1.msra.mxu0 0.0
      %969 = vmatprep.subr.mxu0 0.0
      %970 = vmatpush1.msra.mxu0 0.0
      %971 = vmatprep.subr.mxu0 0.0
      %972 = vmatpush1.msra.mxu0 0.0
      %973 = vmatprep.subr.mxu0 0.0
      %974 = vmatpush1.msra.mxu0 0.0
      %975 = vmatprep.subr.mxu0 0.0
      %976 = vmatpush1.msra.mxu0 0.0
      %977 = vmatprep.subr.mxu0 0.0
      %978 = vmatpush1.msra.mxu0 0.0
      %979 = vmatprep.subr.mxu0 0.0
      %980 = vmatpush1.msra.mxu0 0.0
      %981 = vmatprep.subr.mxu0 0.0
      %982 = vmatpush1.msra.mxu0 0.0
      %983 = vmatprep.subr.mxu0 0.0
      %984 = vmatpush1.msra.mxu0 0.0
      %985 = vmatprep.subr.mxu0 0.0
      %986 = vmatpush1.msra.mxu0 0.0
      %987 = vmatprep.subr.mxu0 0.0
      %988 = vmatpush1.msra.mxu0 0.0
      %989 = vmatprep.subr.mxu0 0.0
      %990 = vmatpush1.msra.mxu0 0.0
      %991 = vmatprep.subr.mxu0 0.0
      %992 = vmatpush1.msra.mxu0 0.0
      %993 = vmatprep.subr.mxu0 0.0
      %994 = vmatpush1.msra.mxu0 0.0
      %995 = vmatprep.subr.mxu0 0.0
      %996 = vmatpush1.msra.mxu0 0.0
      %997 = vmatprep.subr.mxu0 0.0
      %998 = vmatpush1.msra.mxu0 0.0
      %999 = vmatprep.mubr.f32.mxu0 0.0
      %1000 = vmatmul.mubr.f32.gmra.mrb[0].mxu0 %v933
      %v1001 = vpop.f32.mrb[0].mxu0
      %v1002 = vadd.f32 %v930, %v1001
      %v1003 = vpop.f32.mrb[0].mxu0
      %v1004 = vadd.f32 %v930, %v1003
      %1005 = vdwg.mxu0
      %1007 = vrot.lane.b32.xlu0 %v1004, 17
      %v1008 = vpop.permute.xlu0 %1007
      %1011 = vrot.lane.b32.xlu0 %v1002, 17
      %v1012 = vpop.permute.xlu0 %1011
      %v1013 = vsel %vm427, %v1012, %v1008
      %v1016 = vsel %vm427, %v1008, %v1012
      %v1017 = vmul.f32 %v1016, %v435
      %v1018 = vmul.f32 %v1013, %v439
      %1019 = vrot.lane.b32.xlu0 %v1004, 16
      %v1020 = vpop.permute.xlu0 %1019
      %1022 = vrot.lane.b32.xlu0 %v1002, 16
      %v1023 = vpop.permute.xlu0 %1022
      %v1024 = vsel %vm447, %v1023, %v1020
      %v1027 = vsel %vm447, %v1020, %v1023
      %v1028 = vmul.f32 %v1027, %v455
      %v1029 = vmul.f32 %v1024, %v459
      %1030 = vrot.lane.b32.xlu0 %v1004, 15
      %v1031 = vpop.permute.xlu0 %1030
      %1033 = vrot.lane.b32.xlu0 %v1002, 15
      %v1034 = vpop.permute.xlu0 %1033
      %v1035 = vsel %vm467, %v1034, %v1031
      %v1038 = vsel %vm467, %v1031, %v1034
      %v1039 = vmul.f32 %v1038, %v475
      %v1040 = vmul.f32 %v1035, %v479
      %1041 = vrot.lane.b32.xlu0 %v1004, 1
      %v1042 = vpop.permute.xlu0 %1041
      %1044 = vrot.lane.b32.xlu0 %v1002, 1
      %v1045 = vpop.permute.xlu0 %1044
      %v1046 = vsel %vm487, %v1045, %v1042
      %v1049 = vsel %vm487, %v1042, %v1045
      %v1050 = vmul.f32 %v1049, %v495
      %v1051 = vmul.f32 %v1046, %v499
      %1052 = vrot.lane.b32.xlu0 %v1002, 127
      %v1053 = vpop.permute.xlu0 %1052
      %1054 = vrot.lane.b32.xlu0 %v1004, 127
      %v1055 = vpop.permute.xlu0 %1054
      %v1056 = vsel %vm506, %v1053, %v1055
      %v1060 = vsel %vm506, %v1055, %v1053
      %v1061 = vmul.f32 %v1056, %v515
      %v1062 = vmul.f32 %v1060, %v519
      %1063 = vrot.lane.b32.xlu0 %v1002, 113
      %v1064 = vpop.permute.xlu0 %1063
      %1065 = vrot.lane.b32.xlu0 %v1004, 113
      %v1066 = vpop.permute.xlu0 %1065
      %v1067 = vsel %vm526, %v1064, %v1066
      %v1071 = vsel %vm526, %v1066, %v1064
      %v1072 = vmul.f32 %v1067, %v535
      %v1073 = vmul.f32 %v1071, %v539
      %1074 = vrot.lane.b32.xlu0 %v1002, 112
      %v1075 = vpop.permute.xlu0 %1074
      %1076 = vrot.lane.b32.xlu0 %v1004, 112
      %v1077 = vpop.permute.xlu0 %1076
      %v1078 = vsel %vm546, %v1075, %v1077
      %v1082 = vsel %vm546, %v1077, %v1075
      %v1083 = vmul.f32 %v1078, %v555
      %v1084 = vmul.f32 %v1082, %v559
      %1085 = vrot.lane.b32.xlu0 %v1002, 111
      %v1086 = vpop.permute.xlu0 %1085
      %1087 = vrot.lane.b32.xlu0 %v1004, 111
      %v1088 = vpop.permute.xlu0 %1087
      %v1089 = vsel %vm566, %v1086, %v1088
      %v1093 = vsel %vm566, %v1088, %v1086
      %v1094 = vmul.f32 %v1089, %v575
      %v1095 = vmul.f32 %v1093, %v579
      %v1096 = vld [vmem:[%s8] sm:$0xff]
      %v1097 = vld [vmem:[%s9] sm:$0xff]
      %1099 = vset.pattern.permute.xlu0 0
      %1100 = vperm.xlu0 %1099, %v1097
      %v1101 = vpop.permute.xlu0 %1100
      %v1104 = vsel %vm589, %v1096, 0
      %1106 = vmatprep.subr.mxu0 %v1018
      %1107 = vmatpush1.msra.mxu0 %v1017
      %1108 = vmatprep.subr.mxu0 %v1029
      %1109 = vmatpush1.msra.mxu0 %v1028
      %1110 = vmatprep.subr.mxu0 %v1040
      %1111 = vmatpush1.msra.mxu0 %v1039
      %1112 = vmatprep.subr.mxu0 %v1051
      %1113 = vmatpush1.msra.mxu0 %v1050
      %1114 = vmatprep.subr.mxu0 %v1004
      %1115 = vmatpush1.msra.mxu0 %v1002
      %1116 = vmatprep.subr.mxu0 %v1062
      %1117 = vmatpush1.msra.mxu0 %v1061
      %1118 = vmatprep.subr.mxu0 %v1073
      %1119 = vmatpush1.msra.mxu0 %v1072
      %1120 = vmatprep.subr.mxu0 %v1084
      %1121 = vmatpush1.msra.mxu0 %v1083
      %1122 = vmatprep.subr.mxu0 %v1095
      %1123 = vmatpush1.msra.mxu0 %v1094
      %1124 = vmatprep.subr.mxu0 0.0
      %1125 = vmatpush1.msra.mxu0 0.0
      %1126 = vmatprep.subr.mxu0 0.0
      %1127 = vmatpush1.msra.mxu0 0.0
      %1128 = vmatprep.subr.mxu0 0.0
      %1129 = vmatpush1.msra.mxu0 0.0
      %1130 = vmatprep.subr.mxu0 0.0
      %1131 = vmatpush1.msra.mxu0 0.0
      %1132 = vmatprep.subr.mxu0 0.0
      %1133 = vmatpush1.msra.mxu0 0.0
      %1134 = vmatprep.subr.mxu0 0.0
      %1135 = vmatpush1.msra.mxu0 0.0
      %1136 = vmatprep.subr.mxu0 0.0
      %1137 = vmatpush1.msra.mxu0 0.0
      %1138 = vmatprep.subr.mxu0 0.0
      %1139 = vmatpush1.msra.mxu0 0.0
      %1140 = vmatprep.subr.mxu0 0.0
      %1141 = vmatpush1.msra.mxu0 0.0
      %1142 = vmatprep.subr.mxu0 0.0
      %1143 = vmatpush1.msra.mxu0 0.0
      %1144 = vmatprep.subr.mxu0 0.0
      %1145 = vmatpush1.msra.mxu0 0.0
      %1146 = vmatprep.subr.mxu0 0.0
      %1147 = vmatpush1.msra.mxu0 0.0
      %1148 = vmatprep.subr.mxu0 0.0
      %1149 = vmatpush1.msra.mxu0 0.0
      %1150 = vmatprep.subr.mxu0 0.0
      %1151 = vmatpush1.msra.mxu0 0.0
      %1152 = vmatprep.subr.mxu0 0.0
      %1153 = vmatpush1.msra.mxu0 0.0
      %1154 = vmatprep.subr.mxu0 0.0
      %1155 = vmatpush1.msra.mxu0 0.0
      %1156 = vmatprep.subr.mxu0 0.0
      %1157 = vmatpush1.msra.mxu0 0.0
      %1158 = vmatprep.subr.mxu0 0.0
      %1159 = vmatpush1.msra.mxu0 0.0
      %1160 = vmatprep.subr.mxu0 0.0
      %1161 = vmatpush1.msra.mxu0 0.0
      %1162 = vmatprep.subr.mxu0 0.0
      %1163 = vmatpush1.msra.mxu0 0.0
      %1164 = vmatprep.subr.mxu0 0.0
      %1165 = vmatpush1.msra.mxu0 0.0
      %1166 = vmatprep.subr.mxu0 0.0
      %1167 = vmatpush1.msra.mxu0 0.0
      %1168 = vmatprep.subr.mxu0 0.0
      %1169 = vmatpush1.msra.mxu0 0.0
      %1170 = vmatprep.mubr.f32.mxu0 0.0
      %1171 = vmatmul.mubr.f32.gmra.mrb[0].mxu0 %v1104
      %v1172 = vpop.f32.mrb[0].mxu0
      %v1173 = vadd.f32 %v1101, %v1172
      %v1174 = vpop.f32.mrb[0].mxu0
      %v1175 = vadd.f32 %v1101, %v1174
      %1176 = vdwg.mxu0
      %1178 = vrot.lane.b32.xlu0 %v1175, 17
      %v1179 = vpop.permute.xlu0 %1178
      %1182 = vrot.lane.b32.xlu0 %v1173, 17
      %v1183 = vpop.permute.xlu0 %1182
      %v1184 = vsel %vm427, %v1183, %v1179
      %v1187 = vsel %vm427, %v1179, %v1183
      %v1188 = vmul.f32 %v1187, %v435
      %v1189 = vmul.f32 %v1184, %v439
      %1190 = vrot.lane.b32.xlu0 %v1175, 16
      %v1191 = vpop.permute.xlu0 %1190
      %1193 = vrot.lane.b32.xlu0 %v1173, 16
      %v1194 = vpop.permute.xlu0 %1193
      %v1195 = vsel %vm447, %v1194, %v1191
      %v1198 = vsel %vm447, %v1191, %v1194
      %v1199 = vmul.f32 %v1198, %v455
      %v1200 = vmul.f32 %v1195, %v459
      %1201 = vrot.lane.b32.xlu0 %v1175, 15
      %v1202 = vpop.permute.xlu0 %1201
      %1204 = vrot.lane.b32.xlu0 %v1173, 15
      %v1205 = vpop.permute.xlu0 %1204
      %v1206 = vsel %vm467, %v1205, %v1202
      %v1209 = vsel %vm467, %v1202, %v1205
      %v1210 = vmul.f32 %v1209, %v475
      %v1211 = vmul.f32 %v1206, %v479
      %1212 = vrot.lane.b32.xlu0 %v1175, 1
      %v1213 = vpop.permute.xlu0 %1212
      %1215 = vrot.lane.b32.xlu0 %v1173, 1
      %v1216 = vpop.permute.xlu0 %1215
      %v1217 = vsel %vm487, %v1216, %v1213
      %v1220 = vsel %vm487, %v1213, %v1216
      %v1221 = vmul.f32 %v1220, %v495
      %v1222 = vmul.f32 %v1217, %v499
      %1223 = vrot.lane.b32.xlu0 %v1173, 127
      %v1224 = vpop.permute.xlu0 %1223
      %1225 = vrot.lane.b32.xlu0 %v1175, 127
      %v1226 = vpop.permute.xlu0 %1225
      %v1227 = vsel %vm506, %v1224, %v1226
      %v1231 = vsel %vm506, %v1226, %v1224
      %v1232 = vmul.f32 %v1227, %v515
      %v1233 = vmul.f32 %v1231, %v519
      %1234 = vrot.lane.b32.xlu0 %v1173, 113
      %v1235 = vpop.permute.xlu0 %1234
      %1236 = vrot.lane.b32.xlu0 %v1175, 113
      %v1237 = vpop.permute.xlu0 %1236
      %v1238 = vsel %vm526, %v1235, %v1237
      %v1242 = vsel %vm526, %v1237, %v1235
      %v1243 = vmul.f32 %v1238, %v535
      %v1244 = vmul.f32 %v1242, %v539
      %1245 = vrot.lane.b32.xlu0 %v1173, 112
      %v1246 = vpop.permute.xlu0 %1245
      %1247 = vrot.lane.b32.xlu0 %v1175, 112
      %v1248 = vpop.permute.xlu0 %1247
      %v1249 = vsel %vm546, %v1246, %v1248
      %v1253 = vsel %vm546, %v1248, %v1246
      %v1254 = vmul.f32 %v1249, %v555
      %v1255 = vmul.f32 %v1253, %v559
      %1256 = vrot.lane.b32.xlu0 %v1173, 111
      %v1257 = vpop.permute.xlu0 %1256
      %1258 = vrot.lane.b32.xlu0 %v1175, 111
      %v1259 = vpop.permute.xlu0 %1258
      %v1260 = vsel %vm566, %v1257, %v1259
      %v1264 = vsel %vm566, %v1259, %v1257
      %v1265 = vmul.f32 %v1260, %v575
      %v1266 = vmul.f32 %v1264, %v579
      %v1267 = vld [vmem:[%s10] sm:$0xf]
      %v1268 = vld [vmem:[%s11] sm:$0xf]
      %1270 = vset.pattern.permute.xlu0 0
      %1271 = vperm.xlu0 %1270, %v1268
      %v1272 = vpop.permute.xlu0 %1271
      %v1275 = vsel %vm589, %v1267, 0
      %1277 = vmatprep.subr.mxu0 %v1189
      %1278 = vmatpush1.msra.mxu0 %v1188
      %1279 = vmatprep.subr.mxu0 %v1200
      %1280 = vmatpush1.msra.mxu0 %v1199
      %1281 = vmatprep.subr.mxu0 %v1211
      %1282 = vmatpush1.msra.mxu0 %v1210
      %1283 = vmatprep.subr.mxu0 %v1222
      %1284 = vmatpush1.msra.mxu0 %v1221
      %1285 = vmatprep.subr.mxu0 %v1175
      %1286 = vmatpush1.msra.mxu0 %v1173
      %1287 = vmatprep.subr.mxu0 %v1233
      %1288 = vmatpush1.msra.mxu0 %v1232
      %1289 = vmatprep.subr.mxu0 %v1244
      %1290 = vmatpush1.msra.mxu0 %v1243
      %1291 = vmatprep.subr.mxu0 %v1255
      %1292 = vmatpush1.msra.mxu0 %v1254
      %1293 = vmatprep.subr.mxu0 %v1266
      %1294 = vmatpush1.msra.mxu0 %v1265
      %1295 = vmatprep.subr.mxu0 0.0
      %1296 = vmatpush1.msra.mxu0 0.0
      %1297 = vmatprep.subr.mxu0 0.0
      %1298 = vmatpush1.msra.mxu0 0.0
      %1299 = vmatprep.subr.mxu0 0.0
      %1300 = vmatpush1.msra.mxu0 0.0
      %1301 = vmatprep.subr.mxu0 0.0
      %1302 = vmatpush1.msra.mxu0 0.0
      %1303 = vmatprep.subr.mxu0 0.0
      %1304 = vmatpush1.msra.mxu0 0.0
      %1305 = vmatprep.subr.mxu0 0.0
      %1306 = vmatpush1.msra.mxu0 0.0
      %1307 = vmatprep.subr.mxu0 0.0
      %1308 = vmatpush1.msra.mxu0 0.0
      %1309 = vmatprep.subr.mxu0 0.0
      %1310 = vmatpush1.msra.mxu0 0.0
      %1311 = vmatprep.subr.mxu0 0.0
      %1312 = vmatpush1.msra.mxu0 0.0
      %1313 = vmatprep.subr.mxu0 0.0
      %1314 = vmatpush1.msra.mxu0 0.0
      %1315 = vmatprep.subr.mxu0 0.0
      %1316 = vmatpush1.msra.mxu0 0.0
      %1317 = vmatprep.subr.mxu0 0.0
      %1318 = vmatpush1.msra.mxu0 0.0
      %1319 = vmatprep.subr.mxu0 0.0
      %1320 = vmatpush1.msra.mxu0 0.0
      %1321 = vmatprep.subr.mxu0 0.0
      %1322 = vmatpush1.msra.mxu0 0.0
      %1323 = vmatprep.subr.mxu0 0.0
      %1324 = vmatpush1.msra.mxu0 0.0
      %1325 = vmatprep.subr.mxu0 0.0
      %1326 = vmatpush1.msra.mxu0 0.0
      %1327 = vmatprep.subr.mxu0 0.0
      %1328 = vmatpush1.msra.mxu0 0.0
      %1329 = vmatprep.subr.mxu0 0.0
      %1330 = vmatpush1.msra.mxu0 0.0
      %1331 = vmatprep.subr.mxu0 0.0
      %1332 = vmatpush1.msra.mxu0 0.0
      %1333 = vmatprep.subr.mxu0 0.0
      %1334 = vmatpush1.msra.mxu0 0.0
      %1335 = vmatprep.subr.mxu0 0.0
      %1336 = vmatpush1.msra.mxu0 0.0
      %1337 = vmatprep.subr.mxu0 0.0
      %1338 = vmatpush1.msra.mxu0 0.0
      %1339 = vmatprep.subr.mxu0 0.0
      %1340 = vmatpush1.msra.mxu0 0.0
      %1341 = vmatprep.mubr.f32.mxu0 0.0
      %1342 = vmatmul.mubr.f32.gmra.mrb[0].mxu0 %v1275
      %v1343 = vpop.f32.mrb[0].mxu0
      %v1344 = vadd.f32 %v1272, %v1343
      %v1345 = vpop.f32.mrb[0].mxu0
      %v1346 = vadd.f32 %v1272, %v1345
      %1347 = vdwg.mxu0
      %v1350 = vcombine.low %v1344, %v1346
      %1352 = vst [vmem:[%s413] sm:$0xff] %v1350
      %p1353 = scmp.lt.s32.totalorder %s23, 1
      %s1354 = scalar_select %p1353, %s23, 1
      %s1355 = smul.addr %s1354, 2
      %s1356 = smul.addr %s1355, 4
      %s1357 = scalar_lea.vmem %s12, %s1356
      // Predicated region
      $region69: #{iir_conv_net_forward.1} parent=67 // pred_check
        %p1358 = pneg %p298
      $region70: #{iir_conv_net_forward.1} parent=67 // pred_check_branch
        %1360 = sbr.rel (%p1358) target = $region72
      $region71: #{iir_conv_net_forward.1} parent=67 // pred_region
        _
      $region72: #{iir_conv_net_forward.1} parent=67 // pred_fallthru
        _
    $region68: #{iir_conv_net_forward.1} parent=5 // pred_fallthru
      _
    %p1361 = scmp.le.s32.totalorder 2, %s18
    // Predicated region
    $region73: #{iir_conv_net_forward.1} parent=5 // pred_check
      %p1362 = pneg %p1361
    $region74: #{iir_conv_net_forward.1} parent=5 // pred_check_branch
      %1364 = sbr.rel (%p1362) target = $region76
    $region75: #{iir_conv_net_forward.1} parent=5 // pred_region
      %s1365 = ssub.s32 %s18, 2
      // Predicated region
      $region77: #{iir_conv_net_forward.1} parent=75 // pred_check
        %p1366 = pneg %p304
      $region78: #{iir_conv_net_forward.1} parent=75 // pred_check_branch
        %1368 = sbr.rel (%p1366) target = $region80
      $region79: #{iir_conv_net_forward.1} parent=75 // pred_region
        %p1369 = scmp.lt.s32.totalorder %s24, 1
        %s1370 = scalar_select %p1369, %s24, 1
        %s1371 = smul.addr %s1370, 2
        %s1372 = smul.addr %s1371, 4
        %s1373 = scalar_lea.vmem %s12, %s1372
      $region80: #{iir_conv_net_forward.1} parent=75 // pred_fallthru
        _
    $region76: #{iir_conv_net_forward.1} parent=5 // pred_fallthru
      _
  $region6: #{iir_conv_net_forward.1} parent=0 // loop_footer
    %s22 = sadd.s32 1, %s18
  $region7: #{iir_conv_net_forward.1} parent=0 // loop_footer_branch
    %17 = sbr.rel target = $region3
  $region8: #{iir_conv_net_forward.1} parent=0 // loop_exit
    _

</llo_original>
